<compile_context>
chip_gen: v6e
topology: v6e:2x2x1
jax: 0.10.0
libtpu: 0.0.40
codegen_flags: <defaults>
</compile_context>

<pallas_src>
import functools

import jax
import jax.numpy as jnp
from jax.experimental import pallas as pl
from jax.experimental.pallas import tpu as pltpu

LANE = 128      # channel dims padded to this (lane width)
_EPS = 1e-5


def _round_up(n, m):
    return ((n + m - 1) // m) * m


# ----------------------------------------------------------------------------
# In-kernel helper: InstanceNorm (biased var, no affine) + SiLU on (Npix, C) f32.
# ----------------------------------------------------------------------------
def _inorm_silu(x, eps):
    inv_n = 1.0 / x.shape[0]
    mean = jnp.sum(x, axis=0, keepdims=True) * inv_n
    cen = x - mean
    var = jnp.sum(cen * cen, axis=0, keepdims=True) * inv_n   # two-pass (centered)
    y = cen * jax.lax.rsqrt(var + eps)
    return y * jax.nn.sigmoid(y)


# ----------------------------------------------------------------------------
# Fused kernel: conv1(s2) -> IN -> SiLU -> (VMEM halo scratch) -> conv2(s1)
#               -> IN -> SiLU, one batch element per grid step.
#   xq_ref : (1, hh, wh, K1p)  bf16   phase-packed conv1 input
#            xq[b, i, j, (ph*2+pw)*Cin + c] = xpad[b, 2i+ph, 2j+pw, c]
#   w1_ref : (4, K1p, Coutp)   f32    2x2 "quad" taps (di*2+dj)
#   w2_ref : (9, Coutp, Coutp) f32    3x3 taps (ky*3+kx)
#   o_ref  : (1, ho, wo, Coutp) bf16
#   y1_scr : (ho+2, wo+2, Coutp) f32  zero-haloed conv1 output (never hits HBM)
# ----------------------------------------------------------------------------
def down_block_kernel(xq_ref, w1_ref, w2_ref, o_ref, y1_scr, *, ho, wo, eps):
    k1_p = w1_ref.shape[1]
    cout_p = w1_ref.shape[2]
    npix = ho * wo

    # ---- conv1: 2x2 stride-1 conv over phase-packed channels (4 matmuls) ----
    xf = xq_ref[0].astype(jnp.float32)                 # single upcast pass
    acc = jnp.zeros((npix, cout_p), jnp.float32)
    for di in range(2):
        for dj in range(2):
            sl = xf[di:di + ho, dj:dj + wo, :]         # static shifts only
            acc = acc + jnp.dot(sl.reshape(npix, k1_p), w1_ref[2 * di + dj],
                                preferred_element_type=jnp.float32)
    y1 = _inorm_silu(acc, eps)                         # (npix, cout_p) f32

    # ---- stage y1 on-chip: zero halo + interior write (no HBM round trip) ----
    y1_scr[...] = jnp.zeros(y1_scr.shape, y1_scr.dtype)
    y1_scr[pl.ds(1, ho), pl.ds(1, wo), :] = y1.reshape(ho, wo, cout_p)

    # ---- conv2: 3x3 stride-1 conv, 9 accumulating matmuls on the scratch ----
    # TODO(synk): realize the kx in {1,2} shifts with pltpu.roll (XLU) + aligned
    # slices to avoid sublane-offset relayout copies.
    acc2 = jnp.zeros((npix, cout_p), jnp.float32)
    for ky in range(3):
        for kx in range(3):
            sl = y1_scr[pl.ds(ky, ho), pl.ds(kx, wo), :]
            acc2 = acc2 + jnp.dot(sl.reshape(npix, cout_p), w2_ref[3 * ky + kx],
                                  preferred_element_type=jnp.float32)
    y2 = _inorm_silu(acc2, eps)
    o_ref[0] = y2.reshape(ho, wo, cout_p).astype(o_ref.dtype)


def _down_block_pallas(xq, w1q, w2t, ho, wo, eps=_EPS):
    B, hh, wh, k1_p = xq.shape
    cout_p = w1q.shape[-1]
    npix = ho * wo

    kern = functools.partial(down_block_kernel, ho=ho, wo=wo, eps=eps)

    # VMEM budget from the actual block sizes (default double-buffering on the
    # pipelined blocks), with 2x headroom; clamped to stay under v7x's 64 MiB.
    blk_bytes = (2 * hh * wh * k1_p * 2              # xq block, bf16, 2 buffers
                 + 2 * 4 * k1_p * cout_p * 4         # w1 taps, f32
                 + 2 * 9 * cout_p * cout_p * 4       # w2 taps, f32
                 + 2 * npix * cout_p * 2             # output block, bf16
                 + (ho + 2) * (wo + 2) * cout_p * 4  # y1 halo scratch
                 + hh * wh * k1_p * 4                # upcast input value
                 + 2 * npix * cout_p * 4)            # f32 accumulators
    vmem_limit = int(min(48 * 2**20, max(16 * 2**20, 2 * blk_bytes)))

    flops = 2 * B * npix * (4 * k1_p * cout_p + 9 * cout_p * cout_p)
    bytes_accessed = int(xq.size * 2 + w1q.size * 4 + w2t.size * 4
                         + B * npix * cout_p * 2)
    cost = pl.CostEstimate(flops=flops,
                           transcendentals=2 * B * npix * cout_p,
                           bytes_accessed=bytes_accessed)

    return pl.pallas_call(
        kern,
        out_shape=jax.ShapeDtypeStruct((B, ho, wo, cout_p), jnp.bfloat16),
        grid=(B,),
        in_specs=[
            pl.BlockSpec((1, hh, wh, k1_p), lambda b: (b, 0, 0, 0)),
            pl.BlockSpec((4, k1_p, cout_p), lambda b: (0, 0, 0)),
            pl.BlockSpec((9, cout_p, cout_p), lambda b: (0, 0, 0)),
        ],
        out_specs=pl.BlockSpec((1, ho, wo, cout_p), lambda b: (b, 0, 0, 0)),
        scratch_shapes=[pltpu.VMEM((ho + 2, wo + 2, cout_p), jnp.float32)],
        compiler_params=pltpu.CompilerParams(
            dimension_semantics=("parallel",),
            vmem_limit_bytes=vmem_limit),
        cost_estimate=cost,
    )(xq, w1q, w2t)


# ----------------------------------------------------------------------------
# Host-side weight repacking.
# ----------------------------------------------------------------------------
def _pack_w1_quad(w_oihw, k1_p, cout_p):
    """3x3 stride-2 conv == 2x2 stride-1 conv over 4*Cin phase-packed channels.

    W1q[di*2+dj, (ph*2+pw)*Cin + c, co] = w[co, c, 2*di+ph, 2*dj+pw]  (0 if k>2)
    """
    cout, cin, _, _ = w_oihw.shape
    wt = jnp.transpose(w_oihw, (2, 3, 1, 0))                 # (ky, kx, cin, cout)
    wq = jnp.zeros((2, 2, 2, 2, cin, cout), jnp.float32)     # (di, dj, ph, pw, c, co)
    for di in range(2):
        for dj in range(2):
            for ph in range(2):
                for pw in range(2):
                    ky, kx = 2 * di + ph, 2 * dj + pw
                    if ky <= 2 and kx <= 2:
                        wq = wq.at[di, dj, ph, pw].set(wt[ky, kx])
    wq = wq.reshape(4, 4 * cin, cout)
    wq = jnp.pad(wq, ((0, 0), (0, k1_p - 4 * cin), (0, cout_p - cout)))
    return wq.astype(jnp.float32)


def _pack_w2_taps(w_oihw, cin_p, cout_p):
    """3x3 stride-1 conv weights, tap-major: (ky*3+kx, Cin_p, Cout_p)."""
    cout, cin, k, _ = w_oihw.shape
    w = jnp.transpose(w_oihw, (2, 3, 1, 0)).reshape(k * k, cin, cout)
    w = jnp.pad(w, ((0, 0), (0, cin_p - cin), (0, cout_p - cout)))
    return w.astype(jnp.float32)


# ----------------------------------------------------------------------------
# Host-side forward: embedding bias + layout/phase packing + fused kernel.
# ----------------------------------------------------------------------------
def down_block_forward(x_nchw, time_emb, cond_emb, params, eps=_EPS):
    B, cin, H, W = x_nchw.shape
    assert H % 2 == 0 and W % 2 == 0, "demo path assumes even H, W"
    cout = params["w1_oihw"].shape[0]
    ho, wo = H // 2, W // 2
    hh, wh = ho + 1, wo + 1
    k1 = 4 * cin
    k1_p = _round_up(max(k1, LANE), LANE)
    cout_p = _round_up(max(cout, LANE), LANE)

    # Embedding bias: tiny (B,E)x(E,Cin) matmuls stay in XLA; the broadcast add
    # fuses into the layout pass below and is applied BEFORE zero padding.
    silu = jax.nn.silu
    bias = (silu(time_emb) @ params["wt"] + params["bt"]
            + silu(cond_emb) @ params["wc"] + params["bc"])           # (B, Cin)

    x_nhwc = jnp.transpose(x_nchw, (0, 2, 3, 1)) + bias[:, None, None, :]
    xpad = jnp.pad(x_nhwc, ((0, 0), (1, 1), (1, 1), (0, 0)))          # spatial pad 1
    # Space-to-depth phase pack: xq[b,i,j,(ph*2+pw)*Cin+c] = xpad[b,2i+ph,2j+pw,c]
    xq = xpad.reshape(B, hh, 2, wh, 2, cin)
    xq = jnp.transpose(xq, (0, 1, 3, 2, 4, 5)).reshape(B, hh, wh, k1)
    xq = jnp.pad(xq, ((0, 0), (0, 0), (0, 0), (0, k1_p - k1))).astype(jnp.bfloat16)

    w1q = _pack_w1_quad(params["w1_oihw"], k1_p, cout_p)
    w2t = _pack_w2_taps(params["w2_oihw"], cout_p, cout_p)

    y2 = _down_block_pallas(xq, w1q, w2t, ho, wo, eps)                # (B,ho,wo,Cout_p) bf16
    return jnp.transpose(y2[..., :cout].astype(jnp.float32), (0, 3, 1, 2))


# ----------------------------------------------------------------------------
# Pure-JAX f32 reference (sanity check).
# ----------------------------------------------------------------------------
def reference_forward(x, t, c, params, eps=_EPS):
    silu = jax.nn.silu
    tb = silu(t) @ params["wt"] + params["bt"]
    cb = silu(c) @ params["wc"] + params["bc"]
    xb = x + tb[:, :, None, None] + cb[:, :, None, None]

    def conv(z, w, stride):
        return jax.lax.conv_general_dilated(
            z, w, window_strides=(stride, stride), padding=((1, 1), (1, 1)),
            dimension_numbers=("NCHW", "OIHW", "NCHW"))

    def inorm_silu(z):
        m = jnp.mean(z, axis=(2, 3), keepdims=True)
        v = jnp.mean((z - m) ** 2, axis=(2, 3), keepdims=True)
        return silu((z - m) * jax.lax.rsqrt(v + eps))

    y = inorm_silu(conv(xb, params["w1_oihw"], 2))
    y = inorm_silu(conv(y, params["w2_oihw"], 1))
    return y


# ----------------------------------------------------------------------------
# Deterministic parameter init + demo run.
# ----------------------------------------------------------------------------
def make_params(key, in_ch, out_ch, time_emb_dim, cond_emb_dim):
    ks = jax.random.split(key, 6)
    scale = 0.1
    return {
        # Linear(time_emb_dim -> in_ch), stored transposed as (E, Cin)
        "wt": scale * jax.random.normal(ks[0], (time_emb_dim, in_ch), jnp.float32),
        "bt": scale * jax.random.normal(ks[1], (1, in_ch), jnp.float32),
        "wc": scale * jax.random.normal(ks[2], (cond_emb_dim, in_ch), jnp.float32),
        "bc": scale * jax.random.normal(ks[3], (1, in_ch), jnp.float32),
        # conv weights in PyTorch OIHW layout (bias=False per MONAI default)
        "w1_oihw": scale * jax.random.normal(ks[4], (out_ch, in_ch, 3, 3), jnp.float32),
        "w2_oihw": scale * jax.random.normal(ks[5], (out_ch, out_ch, 3, 3), jnp.float32),
    }


if __name__ == "__main__":
    B, in_ch, out_ch = 2, 4, 8
    H = W = 16
    time_emb_dim = 32
    cond_emb_dim = 32

    key = jax.random.PRNGKey(0)
    kx, kt, kc, kp = jax.random.split(key, 4)
    x = jax.random.normal(kx, (B, in_ch, H, W), jnp.float32)
    time_emb = jax.random.normal(kt, (B, time_emb_dim), jnp.float32)
    cond_emb = jax.random.normal(kc, (B, cond_emb_dim), jnp.float32)
    params = make_params(kp, in_ch, out_ch, time_emb_dim, cond_emb_dim)

    fwd = jax.jit(down_block_forward)
    y = jax.block_until_ready(fwd(x, time_emb, cond_emb, params))
    y_ref = jax.block_until_ready(reference_forward(x, time_emb, cond_emb, params))

    assert y.shape == (B, out_ch, H // 2, W // 2), y.shape
    # bf16 input quantization + bf16-precision MXU passes + bf16 output store
    # -> relaxed tolerance vs f32 reference (intentional).
    max_err = float(jnp.max(jnp.abs(y - y_ref)))
    assert jnp.allclose(y, y_ref, atol=5e-2, rtol=5e-2), max_err

    print("KERNEL_OK")
</pallas_src>

<mosaic_0001>
module attributes {stable_mosaic.version = 11 : i64} {
  func.func @down_block_kernel(%arg0: i32, %arg1: memref<1x9x9x128xbf16, #tpu.memory_space<vmem>>, %arg2: memref<4x128x128xf32, #tpu.memory_space<vmem>>, %arg3: memref<9x128x128xf32, #tpu.memory_space<vmem>>, %arg4: memref<1x8x8x128xbf16, #tpu.memory_space<vmem>>, %arg5: memref<10x10x128xf32, #tpu.memory_space<vmem>>) attributes {dimension_semantics = [#tpu.dimension_semantics<parallel>], iteration_bounds = array<i64: 2>, scalar_prefetch = 0 : i64, scratch_operands = 1 : i64, tpu.core_type = #tpu.core_type<tc>, window_params = [{transform_indices = @transform_0, window_bounds = array<i64: 1, 9, 9, 128>}, {pipeline_mode = #tpu.pipeline_mode<synchronous>, transform_indices = @transform_1, window_bounds = array<i64: 4, 128, 128>}, {pipeline_mode = #tpu.pipeline_mode<synchronous>, transform_indices = @transform_2, window_bounds = array<i64: 9, 128, 128>}, {transform_indices = @transform_3, window_bounds = array<i64: 1, 8, 8, 128>}]} {
    %c0 = arith.constant 0 : index
    %c0_0 = arith.constant 0 : index
    %c0_1 = arith.constant 0 : index
    %c0_2 = arith.constant 0 : index
    %0 = vector.load %arg1[%c0, %c0_0, %c0_1, %c0_2] : memref<1x9x9x128xbf16, #tpu.memory_space<vmem>>, vector<1x9x9x128xbf16>
    %1 = vector.shape_cast %0 : vector<1x9x9x128xbf16> to vector<9x9x128xbf16>
    %2 = arith.extf %1 : vector<9x9x128xbf16> to vector<9x9x128xf32>
    %cst = arith.constant 0.000000e+00 : f32
    %3 = vector.broadcast %cst : f32 to vector<64x128xf32>
    %4 = vector.extract_strided_slice %2 {offsets = [0, 0, 0], sizes = [8, 8, 128], strides = [1, 1, 1]} : vector<9x9x128xf32> to vector<8x8x128xf32>
    %5 = vector.shape_cast %4 : vector<8x8x128xf32> to vector<64x128xf32>
    %c0_3 = arith.constant 0 : index
    %c0_4 = arith.constant 0 : index
    %c0_5 = arith.constant 0 : index
    %6 = vector.load %arg2[%c0_3, %c0_4, %c0_5] : memref<4x128x128xf32, #tpu.memory_space<vmem>>, vector<1x128x128xf32>
    %7 = vector.shape_cast %6 : vector<1x128x128xf32> to vector<128x128xf32>
    %cst_6 = arith.constant dense<0.000000e+00> : vector<64x128xf32>
    %8 = tpu.matmul %5, %7, %cst_6 {dimension_numbers = #tpu.dot_dimension_numbers<[1], [0], [0], [1], [0, 0, 1, 1], [], []>} : vector<64x128xf32>, vector<128x128xf32>, vector<64x128xf32> -> vector<64x128xf32>
    %9 = arith.addf %3, %8 : vector<64x128xf32>
    %10 = vector.extract_strided_slice %2 {offsets = [0, 1, 0], sizes = [8, 8, 128], strides = [1, 1, 1]} : vector<9x9x128xf32> to vector<8x8x128xf32>
    %11 = vector.shape_cast %10 : vector<8x8x128xf32> to vector<64x128xf32>
    %c1 = arith.constant 1 : index
    %c0_7 = arith.constant 0 : index
    %c0_8 = arith.constant 0 : index
    %12 = vector.load %arg2[%c1, %c0_7, %c0_8] : memref<4x128x128xf32, #tpu.memory_space<vmem>>, vector<1x128x128xf32>
    %13 = vector.shape_cast %12 : vector<1x128x128xf32> to vector<128x128xf32>
    %cst_9 = arith.constant dense<0.000000e+00> : vector<64x128xf32>
    %14 = tpu.matmul %11, %13, %cst_9 {dimension_numbers = #tpu.dot_dimension_numbers<[1], [0], [0], [1], [0, 0, 1, 1], [], []>} : vector<64x128xf32>, vector<128x128xf32>, vector<64x128xf32> -> vector<64x128xf32>
    %15 = arith.addf %9, %14 : vector<64x128xf32>
    %16 = vector.extract_strided_slice %2 {offsets = [1, 0, 0], sizes = [8, 8, 128], strides = [1, 1, 1]} : vector<9x9x128xf32> to vector<8x8x128xf32>
    %17 = vector.shape_cast %16 : vector<8x8x128xf32> to vector<64x128xf32>
    %c2 = arith.constant 2 : index
    %c0_10 = arith.constant 0 : index
    %c0_11 = arith.constant 0 : index
    %18 = vector.load %arg2[%c2, %c0_10, %c0_11] : memref<4x128x128xf32, #tpu.memory_space<vmem>>, vector<1x128x128xf32>
    %19 = vector.shape_cast %18 : vector<1x128x128xf32> to vector<128x128xf32>
    %cst_12 = arith.constant dense<0.000000e+00> : vector<64x128xf32>
    %20 = tpu.matmul %17, %19, %cst_12 {dimension_numbers = #tpu.dot_dimension_numbers<[1], [0], [0], [1], [0, 0, 1, 1], [], []>} : vector<64x128xf32>, vector<128x128xf32>, vector<64x128xf32> -> vector<64x128xf32>
    %21 = arith.addf %15, %20 : vector<64x128xf32>
    %22 = vector.extract_strided_slice %2 {offsets = [1, 1, 0], sizes = [8, 8, 128], strides = [1, 1, 1]} : vector<9x9x128xf32> to vector<8x8x128xf32>
    %23 = vector.shape_cast %22 : vector<8x8x128xf32> to vector<64x128xf32>
    %c3 = arith.constant 3 : index
    %c0_13 = arith.constant 0 : index
    %c0_14 = arith.constant 0 : index
    %24 = vector.load %arg2[%c3, %c0_13, %c0_14] : memref<4x128x128xf32, #tpu.memory_space<vmem>>, vector<1x128x128xf32>
    %25 = vector.shape_cast %24 : vector<1x128x128xf32> to vector<128x128xf32>
    %cst_15 = arith.constant dense<0.000000e+00> : vector<64x128xf32>
    %26 = tpu.matmul %23, %25, %cst_15 {dimension_numbers = #tpu.dot_dimension_numbers<[1], [0], [0], [1], [0, 0, 1, 1], [], []>} : vector<64x128xf32>, vector<128x128xf32>, vector<64x128xf32> -> vector<64x128xf32>
    %27 = arith.addf %21, %26 : vector<64x128xf32>
    %cst_16 = arith.constant dense<0.000000e+00> : vector<128xf32>
    %28 = vector.multi_reduction <add>, %27, %cst_16 [0] : vector<64x128xf32> to vector<128xf32>
    %29 = vector.shape_cast %28 : vector<128xf32> to vector<1x128xf32>
    %cst_17 = arith.constant 1.562500e-02 : f32
    %30 = vector.broadcast %cst_17 : f32 to vector<1x128xf32>
    %31 = arith.mulf %29, %30 : vector<1x128xf32>
    %32 = vector.broadcast %31 : vector<1x128xf32> to vector<64x128xf32>
    %33 = arith.subf %27, %32 : vector<64x128xf32>
    %34 = arith.mulf %33, %33 : vector<64x128xf32>
    %cst_18 = arith.constant dense<0.000000e+00> : vector<128xf32>
    %35 = vector.multi_reduction <add>, %34, %cst_18 [0] : vector<64x128xf32> to vector<128xf32>
    %36 = vector.shape_cast %35 : vector<128xf32> to vector<1x128xf32>
    %cst_19 = arith.constant 1.562500e-02 : f32
    %37 = vector.broadcast %cst_19 : f32 to vector<1x128xf32>
    %38 = arith.mulf %36, %37 : vector<1x128xf32>
    %cst_20 = arith.constant 9.99999974E-6 : f32
    %39 = vector.broadcast %cst_20 : f32 to vector<1x128xf32>
    %40 = arith.addf %38, %39 : vector<1x128xf32>
    %41 = math.rsqrt %40 : vector<1x128xf32>
    %42 = vector.broadcast %41 : vector<1x128xf32> to vector<64x128xf32>
    %43 = arith.mulf %33, %42 : vector<64x128xf32>
    %44 = arith.negf %43 : vector<64x128xf32>
    %45 = math.exp %44 : vector<64x128xf32>
    %cst_21 = arith.constant 1.000000e+00 : f32
    %46 = vector.broadcast %cst_21 : f32 to vector<64x128xf32>
    %47 = arith.addf %46, %45 : vector<64x128xf32>
    %48 = arith.divf %46, %47 : vector<64x128xf32>
    %49 = arith.mulf %43, %48 : vector<64x128xf32>
    %cst_22 = arith.constant 0.000000e+00 : f32
    %50 = vector.broadcast %cst_22 : f32 to vector<10x10x128xf32>
    %c0_23 = arith.constant 0 : index
    %c0_24 = arith.constant 0 : index
    %c0_25 = arith.constant 0 : index
    %51 = vector.load %arg5[%c0_23, %c0_24, %c0_25] : memref<10x10x128xf32, #tpu.memory_space<vmem>>, vector<10x10x128xf32>
    tpu.vector_store %arg5[%c0_23, %c0_24, %c0_25], %50 {strides = array<i32>} : memref<10x10x128xf32, #tpu.memory_space<vmem>>, vector<10x10x128xf32>,
    %52 = vector.shape_cast %49 : vector<64x128xf32> to vector<8x8x128xf32>
    %c1_26 = arith.constant 1 : index
    %c1_27 = arith.constant 1 : index
    %c0_28 = arith.constant 0 : index
    %53 = vector.load %arg5[%c1_26, %c1_27, %c0_28] : memref<10x10x128xf32, #tpu.memory_space<vmem>>, vector<8x8x128xf32>
    tpu.vector_store %arg5[%c1_26, %c1_27, %c0_28], %52 {strides = array<i32>} : memref<10x10x128xf32, #tpu.memory_space<vmem>>, vector<8x8x128xf32>,
    %cst_29 = arith.constant 0.000000e+00 : f32
    %54 = vector.broadcast %cst_29 : f32 to vector<64x128xf32>
    %c0_30 = arith.constant 0 : index
    %c0_31 = arith.constant 0 : index
    %c0_32 = arith.constant 0 : index
    %55 = vector.load %arg5[%c0_30, %c0_31, %c0_32] : memref<10x10x128xf32, #tpu.memory_space<vmem>>, vector<8x8x128xf32>
    %56 = vector.shape_cast %55 : vector<8x8x128xf32> to vector<64x128xf32>
    %c0_33 = arith.constant 0 : index
    %c0_34 = arith.constant 0 : index
    %c0_35 = arith.constant 0 : index
    %57 = vector.load %arg3[%c0_33, %c0_34, %c0_35] : memref<9x128x128xf32, #tpu.memory_space<vmem>>, vector<1x128x128xf32>
    %58 = vector.shape_cast %57 : vector<1x128x128xf32> to vector<128x128xf32>
    %cst_36 = arith.constant dense<0.000000e+00> : vector<64x128xf32>
    %59 = tpu.matmul %56, %58, %cst_36 {dimension_numbers = #tpu.dot_dimension_numbers<[1], [0], [0], [1], [0, 0, 1, 1], [], []>} : vector<64x128xf32>, vector<128x128xf32>, vector<64x128xf32> -> vector<64x128xf32>
    %60 = arith.addf %54, %59 : vector<64x128xf32>
    %c0_37 = arith.constant 0 : index
    %c1_38 = arith.constant 1 : index
    %c0_39 = arith.constant 0 : index
    %61 = vector.load %arg5[%c0_37, %c1_38, %c0_39] : memref<10x10x128xf32, #tpu.memory_space<vmem>>, vector<8x8x128xf32>
    %62 = vector.shape_cast %61 : vector<8x8x128xf32> to vector<64x128xf32>
    %c1_40 = arith.constant 1 : index
    %c0_41 = arith.constant 0 : index
    %c0_42 = arith.constant 0 : index
    %63 = vector.load %arg3[%c1_40, %c0_41, %c0_42] : memref<9x128x128xf32, #tpu.memory_space<vmem>>, vector<1x128x128xf32>
    %64 = vector.shape_cast %63 : vector<1x128x128xf32> to vector<128x128xf32>
    %cst_43 = arith.constant dense<0.000000e+00> : vector<64x128xf32>
    %65 = tpu.matmul %62, %64, %cst_43 {dimension_numbers = #tpu.dot_dimension_numbers<[1], [0], [0], [1], [0, 0, 1, 1], [], []>} : vector<64x128xf32>, vector<128x128xf32>, vector<64x128xf32> -> vector<64x128xf32>
    %66 = arith.addf %60, %65 : vector<64x128xf32>
    %c0_44 = arith.constant 0 : index
    %c2_45 = arith.constant 2 : index
    %c0_46 = arith.constant 0 : index
    %67 = vector.load %arg5[%c0_44, %c2_45, %c0_46] : memref<10x10x128xf32, #tpu.memory_space<vmem>>, vector<8x8x128xf32>
    %68 = vector.shape_cast %67 : vector<8x8x128xf32> to vector<64x128xf32>
    %c2_47 = arith.constant 2 : index
    %c0_48 = arith.constant 0 : index
    %c0_49 = arith.constant 0 : index
    %69 = vector.load %arg3[%c2_47, %c0_48, %c0_49] : memref<9x128x128xf32, #tpu.memory_space<vmem>>, vector<1x128x128xf32>
    %70 = vector.shape_cast %69 : vector<1x128x128xf32> to vector<128x128xf32>
    %cst_50 = arith.constant dense<0.000000e+00> : vector<64x128xf32>
    %71 = tpu.matmul %68, %70, %cst_50 {dimension_numbers = #tpu.dot_dimension_numbers<[1], [0], [0], [1], [0, 0, 1, 1], [], []>} : vector<64x128xf32>, vector<128x128xf32>, vector<64x128xf32> -> vector<64x128xf32>
    %72 = arith.addf %66, %71 : vector<64x128xf32>
    %c1_51 = arith.constant 1 : index
    %c0_52 = arith.constant 0 : index
    %c0_53 = arith.constant 0 : index
    %73 = vector.load %arg5[%c1_51, %c0_52, %c0_53] : memref<10x10x128xf32, #tpu.memory_space<vmem>>, vector<8x8x128xf32>
    %74 = vector.shape_cast %73 : vector<8x8x128xf32> to vector<64x128xf32>
    %c3_54 = arith.constant 3 : index
    %c0_55 = arith.constant 0 : index
    %c0_56 = arith.constant 0 : index
    %75 = vector.load %arg3[%c3_54, %c0_55, %c0_56] : memref<9x128x128xf32, #tpu.memory_space<vmem>>, vector<1x128x128xf32>
    %76 = vector.shape_cast %75 : vector<1x128x128xf32> to vector<128x128xf32>
    %cst_57 = arith.constant dense<0.000000e+00> : vector<64x128xf32>
    %77 = tpu.matmul %74, %76, %cst_57 {dimension_numbers = #tpu.dot_dimension_numbers<[1], [0], [0], [1], [0, 0, 1, 1], [], []>} : vector<64x128xf32>, vector<128x128xf32>, vector<64x128xf32> -> vector<64x128xf32>
    %78 = arith.addf %72, %77 : vector<64x128xf32>
    %c1_58 = arith.constant 1 : index
    %c1_59 = arith.constant 1 : index
    %c0_60 = arith.constant 0 : index
    %79 = vector.load %arg5[%c1_58, %c1_59, %c0_60] : memref<10x10x128xf32, #tpu.memory_space<vmem>>, vector<8x8x128xf32>
    %80 = vector.shape_cast %79 : vector<8x8x128xf32> to vector<64x128xf32>
    %c4 = arith.constant 4 : index
    %c0_61 = arith.constant 0 : index
    %c0_62 = arith.constant 0 : index
    %81 = vector.load %arg3[%c4, %c0_61, %c0_62] : memref<9x128x128xf32, #tpu.memory_space<vmem>>, vector<1x128x128xf32>
    %82 = vector.shape_cast %81 : vector<1x128x128xf32> to vector<128x128xf32>
    %cst_63 = arith.constant dense<0.000000e+00> : vector<64x128xf32>
    %83 = tpu.matmul %80, %82, %cst_63 {dimension_numbers = #tpu.dot_dimension_numbers<[1], [0], [0], [1], [0, 0, 1, 1], [], []>} : vector<64x128xf32>, vector<128x128xf32>, vector<64x128xf32> -> vector<64x128xf32>
    %84 = arith.addf %78, %83 : vector<64x128xf32>
    %c1_64 = arith.constant 1 : index
    %c2_65 = arith.constant 2 : index
    %c0_66 = arith.constant 0 : index
    %85 = vector.load %arg5[%c1_64, %c2_65, %c0_66] : memref<10x10x128xf32, #tpu.memory_space<vmem>>, vector<8x8x128xf32>
    %86 = vector.shape_cast %85 : vector<8x8x128xf32> to vector<64x128xf32>
    %c5 = arith.constant 5 : index
    %c0_67 = arith.constant 0 : index
    %c0_68 = arith.constant 0 : index
    %87 = vector.load %arg3[%c5, %c0_67, %c0_68] : memref<9x128x128xf32, #tpu.memory_space<vmem>>, vector<1x128x128xf32>
    %88 = vector.shape_cast %87 : vector<1x128x128xf32> to vector<128x128xf32>
    %cst_69 = arith.constant dense<0.000000e+00> : vector<64x128xf32>
    %89 = tpu.matmul %86, %88, %cst_69 {dimension_numbers = #tpu.dot_dimension_numbers<[1], [0], [0], [1], [0, 0, 1, 1], [], []>} : vector<64x128xf32>, vector<128x128xf32>, vector<64x128xf32> -> vector<64x128xf32>
    %90 = arith.addf %84, %89 : vector<64x128xf32>
    %c2_70 = arith.constant 2 : index
    %c0_71 = arith.constant 0 : index
    %c0_72 = arith.constant 0 : index
    %91 = vector.load %arg5[%c2_70, %c0_71, %c0_72] : memref<10x10x128xf32, #tpu.memory_space<vmem>>, vector<8x8x128xf32>
    %92 = vector.shape_cast %91 : vector<8x8x128xf32> to vector<64x128xf32>
    %c6 = arith.constant 6 : index
    %c0_73 = arith.constant 0 : index
    %c0_74 = arith.constant 0 : index
    %93 = vector.load %arg3[%c6, %c0_73, %c0_74] : memref<9x128x128xf32, #tpu.memory_space<vmem>>, vector<1x128x128xf32>
    %94 = vector.shape_cast %93 : vector<1x128x128xf32> to vector<128x128xf32>
    %cst_75 = arith.constant dense<0.000000e+00> : vector<64x128xf32>
    %95 = tpu.matmul %92, %94, %cst_75 {dimension_numbers = #tpu.dot_dimension_numbers<[1], [0], [0], [1], [0, 0, 1, 1], [], []>} : vector<64x128xf32>, vector<128x128xf32>, vector<64x128xf32> -> vector<64x128xf32>
    %96 = arith.addf %90, %95 : vector<64x128xf32>
    %c2_76 = arith.constant 2 : index
    %c1_77 = arith.constant 1 : index
    %c0_78 = arith.constant 0 : index
    %97 = vector.load %arg5[%c2_76, %c1_77, %c0_78] : memref<10x10x128xf32, #tpu.memory_space<vmem>>, vector<8x8x128xf32>
    %98 = vector.shape_cast %97 : vector<8x8x128xf32> to vector<64x128xf32>
    %c7 = arith.constant 7 : index
    %c0_79 = arith.constant 0 : index
    %c0_80 = arith.constant 0 : index
    %99 = vector.load %arg3[%c7, %c0_79, %c0_80] : memref<9x128x128xf32, #tpu.memory_space<vmem>>, vector<1x128x128xf32>
    %100 = vector.shape_cast %99 : vector<1x128x128xf32> to vector<128x128xf32>
    %cst_81 = arith.constant dense<0.000000e+00> : vector<64x128xf32>
    %101 = tpu.matmul %98, %100, %cst_81 {dimension_numbers = #tpu.dot_dimension_numbers<[1], [0], [0], [1], [0, 0, 1, 1], [], []>} : vector<64x128xf32>, vector<128x128xf32>, vector<64x128xf32> -> vector<64x128xf32>
    %102 = arith.addf %96, %101 : vector<64x128xf32>
    %c2_82 = arith.constant 2 : index
    %c2_83 = arith.constant 2 : index
    %c0_84 = arith.constant 0 : index
    %103 = vector.load %arg5[%c2_82, %c2_83, %c0_84] : memref<10x10x128xf32, #tpu.memory_space<vmem>>, vector<8x8x128xf32>
    %104 = vector.shape_cast %103 : vector<8x8x128xf32> to vector<64x128xf32>
    %c8 = arith.constant 8 : index
    %c0_85 = arith.constant 0 : index
    %c0_86 = arith.constant 0 : index
    %105 = vector.load %arg3[%c8, %c0_85, %c0_86] : memref<9x128x128xf32, #tpu.memory_space<vmem>>, vector<1x128x128xf32>
    %106 = vector.shape_cast %105 : vector<1x128x128xf32> to vector<128x128xf32>
    %cst_87 = arith.constant dense<0.000000e+00> : vector<64x128xf32>
    %107 = tpu.matmul %104, %106, %cst_87 {dimension_numbers = #tpu.dot_dimension_numbers<[1], [0], [0], [1], [0, 0, 1, 1], [], []>} : vector<64x128xf32>, vector<128x128xf32>, vector<64x128xf32> -> vector<64x128xf32>
    %108 = arith.addf %102, %107 : vector<64x128xf32>
    %cst_88 = arith.constant dense<0.000000e+00> : vector<128xf32>
    %109 = vector.multi_reduction <add>, %108, %cst_88 [0] : vector<64x128xf32> to vector<128xf32>
    %110 = vector.shape_cast %109 : vector<128xf32> to vector<1x128xf32>
    %cst_89 = arith.constant 1.562500e-02 : f32
    %111 = vector.broadcast %cst_89 : f32 to vector<1x128xf32>
    %112 = arith.mulf %110, %111 : vector<1x128xf32>
    %113 = vector.broadcast %112 : vector<1x128xf32> to vector<64x128xf32>
    %114 = arith.subf %108, %113 : vector<64x128xf32>
    %115 = arith.mulf %114, %114 : vector<64x128xf32>
    %cst_90 = arith.constant dense<0.000000e+00> : vector<128xf32>
    %116 = vector.multi_reduction <add>, %115, %cst_90 [0] : vector<64x128xf32> to vector<128xf32>
    %117 = vector.shape_cast %116 : vector<128xf32> to vector<1x128xf32>
    %cst_91 = arith.constant 1.562500e-02 : f32
    %118 = vector.broadcast %cst_91 : f32 to vector<1x128xf32>
    %119 = arith.mulf %117, %118 : vector<1x128xf32>
    %cst_92 = arith.constant 9.99999974E-6 : f32
    %120 = vector.broadcast %cst_92 : f32 to vector<1x128xf32>
    %121 = arith.addf %119, %120 : vector<1x128xf32>
    %122 = math.rsqrt %121 : vector<1x128xf32>
    %123 = vector.broadcast %122 : vector<1x128xf32> to vector<64x128xf32>
    %124 = arith.mulf %114, %123 : vector<64x128xf32>
    %125 = arith.negf %124 : vector<64x128xf32>
    %126 = math.exp %125 : vector<64x128xf32>
    %cst_93 = arith.constant 1.000000e+00 : f32
    %127 = vector.broadcast %cst_93 : f32 to vector<64x128xf32>
    %128 = arith.addf %127, %126 : vector<64x128xf32>
    %129 = arith.divf %127, %128 : vector<64x128xf32>
    %130 = arith.mulf %124, %129 : vector<64x128xf32>
    %131 = vector.shape_cast %130 : vector<64x128xf32> to vector<8x8x128xf32>
    %132 = arith.truncf %131 : vector<8x8x128xf32> to vector<8x8x128xbf16>
    %c0_94 = arith.constant 0 : index
    %c0_95 = arith.constant 0 : index
    %c0_96 = arith.constant 0 : index
    %c0_97 = arith.constant 0 : index
    %133 = vector.load %arg4[%c0_94, %c0_95, %c0_96, %c0_97] : memref<1x8x8x128xbf16, #tpu.memory_space<vmem>>, vector<1x8x8x128xbf16>
    %134 = vector.shape_cast %133 : vector<1x8x8x128xbf16> to vector<8x8x128xbf16>
    %135 = vector.shape_cast %132 : vector<8x8x128xbf16> to vector<1x8x8x128xbf16>
    tpu.vector_store %arg4[%c0_94, %c0_95, %c0_96, %c0_97], %135 {strides = array<i32>} : memref<1x8x8x128xbf16, #tpu.memory_space<vmem>>, vector<1x8x8x128xbf16>,
    return
  }
  func.func @transform_0(%arg0: i32) -> (i32, i32, i32, i32) {
    %c0_i32 = arith.constant 0 : i32
    %c0_i32_0 = arith.constant 0 : i32
    %c0_i32_1 = arith.constant 0 : i32
    %c0_i32_2 = arith.constant 0 : i32
    return %arg0, %c0_i32, %c0_i32_0, %c0_i32_1 : i32, i32, i32, i32
  }
  func.func @transform_1(%arg0: i32) -> (i32, i32, i32) {
    %c0_i32 = arith.constant 0 : i32
    %c0_i32_0 = arith.constant 0 : i32
    %c0_i32_1 = arith.constant 0 : i32
    %c0_i32_2 = arith.constant 0 : i32
    return %c0_i32, %c0_i32_0, %c0_i32_1 : i32, i32, i32
  }
  func.func @transform_2(%arg0: i32) -> (i32, i32, i32) {
    %c0_i32 = arith.constant 0 : i32
    %c0_i32_0 = arith.constant 0 : i32
    %c0_i32_1 = arith.constant 0 : i32
    %c0_i32_2 = arith.constant 0 : i32
    return %c0_i32, %c0_i32_0, %c0_i32_1 : i32, i32, i32
  }
  func.func @transform_3(%arg0: i32) -> (i32, i32, i32, i32) {
    %c0_i32 = arith.constant 0 : i32
    %c0_i32_0 = arith.constant 0 : i32
    %c0_i32_1 = arith.constant 0 : i32
    %c0_i32_2 = arith.constant 0 : i32
    return %arg0, %c0_i32, %c0_i32_0, %c0_i32_1 : i32, i32, i32, i32
  }
}

</mosaic_0001>

<llo_original>
// kernel: down_block_forward.1
$region0: #{down_block_forward.1}
  #allocation0 [shape = 'u32[]', space=smem, size = 0x4, offset = 0x4, fixed_abs, tag = 'smem constant byte address 0x4 - core index']
  #allocation1 [shape = 'u32[144,128]{1,0:T(1,128)}', space=vmem, size = 0x12000, scoped, tag = 'internal scratch']
  #allocation2 [shape = 'f32[10,10,128]{2,1,0:T(8,128)}', space=vmem, size = 0x14000, scoped, tag = 'scratch operand']
  %s0 = inlined_call_operand.vmem [shape: bf16[2,9,9,128], index: 0, kind: input, shape index: {}]
  %s1 = inlined_call_operand.vmem [shape: f32[4,128,128], index: 1, kind: input, shape index: {}]
  %s2 = inlined_call_operand.vmem [shape: f32[9,128,128], index: 2, kind: input, shape index: {}]
  %s3 = inlined_call_operand.vmem [shape: bf16[2,8,8,128], index: 3, kind: output, shape index: {}]
  %s4 = sld [smem:[#allocation0]]
  $region45: #{down_block_forward.1} parent=0
    _
  %s6 = ssub.s32 1, %s4
  %s7 = scalar_select 0, %s6, %s4
  loop: start=0, step=1, limit=4
  $region2: #{down_block_forward.1} parent=0 // loop_pre_header
    _
  $region3: #{down_block_forward.1} parent=0 // loop_header
    %s9 = sphi 0, %s13
    %p10 = scmp.ge.s32.totalorder %s9, 4
    %s19 = sphi 0, %s21
    %s22 = sphi 0, %s19
    %s23 = sphi 0, %s22
    %s39 = sphi 0, %s23
    %s43 = sphi 0, %s43
    %s45 = sphi 0, %s43
    %s46 = sphi 0, %s45
    %s60 = sphi 0, %s46
    %s64 = sphi 0, %s64
    %s66 = sphi 0, %s64
    %s67 = sphi 0, %s66
    %s81 = sphi 0, %s67
    %s87 = sphi 0, %s89
    %s90 = sphi 0, %s87
    %s91 = sphi 0, %s90
    %s107 = sphi 0, %s91
  $region4: #{down_block_forward.1} parent=0 // loop_header_branch
    %12 = sbr.rel (%p10) target = $region8
  $region5: #{down_block_forward.1} parent=0 // loop_body
    %s14 = ssub.s32 %s9, 1
    %s15 = ssub.s32 %s9, 2
    %s16 = sadd.s32 %s9, 1
    %s17 = ssub.s32 %s9, %s16
    %p18 = scmp.eq.s32.totalorder %s17, 0
    %s20 = sadd.s32 %s19, 1
    %s21 = scalar_select %p18, %s19, %s20
    %p24 = pneg %p18
    %p25 = scmp.eq.s32.totalorder %s9, 1
    %p26 = por %p24, %p25
    %p27 = scmp.ne.s32.totalorder %s19, %s22
    %p28 = scmp.eq.s32.totalorder %s9, 0
    %p29 = por %p27, %p28
    %p30 = scmp.ne.s32.totalorder %s19, %s22
    %p31 = scmp.eq.s32.totalorder %s14, 1
    %p32 = por %p30, %p31
    %p33 = scmp.ne.s32.totalorder %s22, %s23
    %p34 = scmp.eq.s32.totalorder %s14, 0
    %p35 = por %p33, %p34
    %p36 = scmp.ne.s32.totalorder %s22, %s23
    %p37 = scmp.eq.s32.totalorder %s15, 1
    %p38 = por %p36, %p37
    %p40 = scmp.ne.s32.totalorder %s23, %s39
    %p41 = scmp.eq.s32.totalorder %s15, 0
    %p42 = por %p40, %p41
    %s44 = sadd.s32 %s43, 1
    %p47 = scmp.eq.s32.totalorder %s9, 1
    %p48 = scmp.ne.s32.totalorder %s43, %s45
    %p49 = scmp.eq.s32.totalorder %s9, 0
    %p50 = por %p48, %p49
    %p51 = scmp.ne.s32.totalorder %s43, %s45
    %p52 = scmp.eq.s32.totalorder %s14, 1
    %p53 = por %p51, %p52
    %p54 = scmp.ne.s32.totalorder %s45, %s46
    %p55 = scmp.eq.s32.totalorder %s14, 0
    %p56 = por %p54, %p55
    %p57 = scmp.ne.s32.totalorder %s45, %s46
    %p58 = scmp.eq.s32.totalorder %s15, 1
    %p59 = por %p57, %p58
    %p61 = scmp.ne.s32.totalorder %s46, %s60
    %p62 = scmp.eq.s32.totalorder %s15, 0
    %p63 = por %p61, %p62
    %s65 = sadd.s32 %s64, 1
    %p68 = scmp.eq.s32.totalorder %s9, 1
    %p69 = scmp.ne.s32.totalorder %s64, %s66
    %p70 = scmp.eq.s32.totalorder %s9, 0
    %p71 = por %p69, %p70
    %p72 = scmp.ne.s32.totalorder %s64, %s66
    %p73 = scmp.eq.s32.totalorder %s14, 1
    %p74 = por %p72, %p73
    %p75 = scmp.ne.s32.totalorder %s66, %s67
    %p76 = scmp.eq.s32.totalorder %s14, 0
    %p77 = por %p75, %p76
    %p78 = scmp.ne.s32.totalorder %s66, %s67
    %p79 = scmp.eq.s32.totalorder %s15, 1
    %p80 = por %p78, %p79
    %p82 = scmp.ne.s32.totalorder %s67, %s81
    %p83 = scmp.eq.s32.totalorder %s15, 0
    %p84 = por %p82, %p83
    %s85 = ssub.s32 %s9, %s16
    %p86 = scmp.eq.s32.totalorder %s85, 0
    %s88 = sadd.s32 %s87, 1
    %s89 = scalar_select %p86, %s87, %s88
    %p92 = pneg %p86
    %p93 = scmp.eq.s32.totalorder %s9, 1
    %p94 = por %p92, %p93
    %p95 = scmp.ne.s32.totalorder %s87, %s90
    %p96 = scmp.eq.s32.totalorder %s9, 0
    %p97 = por %p95, %p96
    %p98 = scmp.ne.s32.totalorder %s87, %s90
    %p99 = scmp.eq.s32.totalorder %s14, 1
    %p100 = por %p98, %p99
    %p101 = scmp.ne.s32.totalorder %s90, %s91
    %p102 = scmp.eq.s32.totalorder %s14, 0
    %p103 = por %p101, %p102
    %p104 = scmp.ne.s32.totalorder %s90, %s91
    %p105 = scmp.eq.s32.totalorder %s15, 1
    %p106 = por %p104, %p105
    %p108 = scmp.ne.s32.totalorder %s91, %s107
    %p109 = scmp.eq.s32.totalorder %s15, 0
    %p110 = por %p108, %p109
    %p111 = scmp.le.s32.totalorder 1, %s9
    %p112 = scmp.lt.s32.totalorder %s9, 3
    %p113 = pnand %p111, %p112
    %p114 = pneg %p113
    // Predicated region
    $region9: #{down_block_forward.1} parent=5 // pred_check
      _
    $region10: #{down_block_forward.1} parent=5 // pred_check_branch
      %116 = sbr.rel (%p113) target = $region12
    $region11: #{down_block_forward.1} parent=5 // pred_region
      %s117 = ssub.s32 %s9, 1
      // Predicated region
      $region13: #{down_block_forward.1} parent=11 // pred_check
        %p118 = pneg %p56
      $region14: #{down_block_forward.1} parent=11 // pred_check_branch
        %120 = sbr.rel (%p118) target = $region16
      $region15: #{down_block_forward.1} parent=11 // pred_region
        _
      $region16: #{down_block_forward.1} parent=11 // pred_fallthru
        _
      // Predicated region
      $region17: #{down_block_forward.1} parent=11 // pred_check
        %p121 = pneg %p77
      $region18: #{down_block_forward.1} parent=11 // pred_check_branch
        %123 = sbr.rel (%p121) target = $region20
      $region19: #{down_block_forward.1} parent=11 // pred_region
        _
      $region20: #{down_block_forward.1} parent=11 // pred_fallthru
        _
    $region12: #{down_block_forward.1} parent=5 // pred_fallthru
      _
    %p124 = scmp.lt.s32.totalorder %s9, 2
    // Predicated region
    $region21: #{down_block_forward.1} parent=5 // pred_check
      %p125 = pneg %p124
    $region22: #{down_block_forward.1} parent=5 // pred_check_branch
      %127 = sbr.rel (%p125) target = $region24
    $region23: #{down_block_forward.1} parent=5 // pred_region
      // Predicated region
      $region25: #{down_block_forward.1} parent=23 // pred_check
        %p128 = pneg %p29
      $region26: #{down_block_forward.1} parent=23 // pred_check_branch
        %130 = sbr.rel (%p128) target = $region28
      $region27: #{down_block_forward.1} parent=23 // pred_region
        %p131 = scmp.lt.s32.totalorder %s9, 1
        %s132 = scalar_select %p131, %s9, 1
        %s133 = smul.addr %s132, 18
        %s134 = smul.addr %s133, 4
        %s135 = scalar_lea.vmem %s0, %s134
      $region28: #{down_block_forward.1} parent=23 // pred_fallthru
        _
    $region24: #{down_block_forward.1} parent=5 // pred_fallthru
      _
    %p136 = scmp.le.s32.totalorder 1, %s9
    %p137 = scmp.lt.s32.totalorder %s9, 3
    %p138 = pnand %p136, %p137
    %p139 = pneg %p138
    // Predicated region
    $region29: #{down_block_forward.1} parent=5 // pred_check
      _
    $region30: #{down_block_forward.1} parent=5 // pred_check_branch
      %141 = sbr.rel (%p138) target = $region32
    $region31: #{down_block_forward.1} parent=5 // pred_region
      %s142 = ssub.s32 %s9, 1
      %p143 = scmp.lt.s32.totalorder %s14, 1
      %s144 = scalar_select %p143, %s14, 1
      %s145 = smul.addr %s144, 18
      %s146 = smul.addr %s145, 4
      %s147 = scalar_lea.vmem %s0, %s146
      %p148 = pneg %p35
      %p149 = pneg %p32
      %p150 = pneg %p56
      %p151 = pneg %p53
      %p152 = pneg %p77
      %p153 = pneg %p74
      %p154 = pneg %p103
      %p155 = pneg %p100
      %p156 = scmp.lt.s32.totalorder %s14, 1
      %s157 = scalar_select %p156, %s14, 1
      %s158 = smul.addr %s157, 8
      %s159 = smul.addr %s158, 4
      %s160 = scalar_lea.vmem %s3, %s159
      %p161 = scmp.lt.s32.totalorder %s14, 1
      %s162 = scalar_select %p161, %s14, 1
      %s163 = smul.addr %s162, 18
      %s164 = smul.addr %s163, 4
      %s165 = scalar_lea.vmem %s0, %s164
      %p166 = scmp.lt.s32.totalorder %s14, 1
      %s167 = scalar_select %p166, %s14, 1
      %s168 = smul.addr %s167, 8
      %s169 = smul.addr %s168, 4
      %s170 = scalar_lea.vmem %s3, %s169
      %v171 = vld [vmem:[%s165] sm:$0xf]
      %v172 = vld [vmem:[%s165 + $0x4] sm:$0x1]
      %v173 = vld [vmem:[%s165 + $0x8] sm:$0xf]
      %v174 = vld [vmem:[%s165 + $0xc] sm:$0x1]
      %v175 = vld [vmem:[%s165 + $0x10] sm:$0xf]
      %v176 = vld [vmem:[%s165 + $0x14] sm:$0x1]
      %v177 = vld [vmem:[%s165 + $0x18] sm:$0xf]
      %v178 = vld [vmem:[%s165 + $0x1c] sm:$0x1]
      %v179 = vld [vmem:[%s165 + $0x20] sm:$0xf]
      %v180 = vld [vmem:[%s165 + $0x24] sm:$0x1]
      %v181 = vld [vmem:[%s165 + $0x28] sm:$0xf]
      %v182 = vld [vmem:[%s165 + $0x2c] sm:$0x1]
      %v183 = vld [vmem:[%s165 + $0x30] sm:$0xf]
      %v184 = vld [vmem:[%s165 + $0x34] sm:$0x1]
      %v185 = vld [vmem:[%s165 + $0x38] sm:$0xf]
      %v186 = vld [vmem:[%s165 + $0x3c] sm:$0x1]
      %v187 = vld [vmem:[%s165 + $0x40] sm:$0xf]
      %v188 = vld [vmem:[%s165 + $0x44] sm:$0x1]
      %v189 = vunpack.c.l.bf16 %v171
      %v190 = vunpack.c.l.bf16 %v172
      %v191 = vunpack.c.l.bf16 %v173
      %v192 = vunpack.c.l.bf16 %v174
      %v193 = vunpack.c.l.bf16 %v175
      %v194 = vunpack.c.l.bf16 %v176
      %v195 = vunpack.c.l.bf16 %v177
      %v196 = vunpack.c.l.bf16 %v178
      %v197 = vunpack.c.l.bf16 %v179
      %v198 = vunpack.c.l.bf16 %v180
      %v199 = vunpack.c.l.bf16 %v181
      %v200 = vunpack.c.l.bf16 %v182
      %v201 = vunpack.c.l.bf16 %v183
      %v202 = vunpack.c.l.bf16 %v184
      %v203 = vunpack.c.l.bf16 %v185
      %v204 = vunpack.c.l.bf16 %v186
      %v205 = vunpack.c.l.bf16 %v187
      %v206 = vunpack.c.l.bf16 %v188
      %v207 = vld [vmem:[%s1] sm:$0xff]
      %v208 = vld [vmem:[%s1 + $0x8] sm:$0xff]
      %v209 = vld [vmem:[%s1 + $0x10] sm:$0xff]
      %v210 = vld [vmem:[%s1 + $0x18] sm:$0xff]
      %v211 = vld [vmem:[%s1 + $0x20] sm:$0xff]
      %v212 = vld [vmem:[%s1 + $0x28] sm:$0xff]
      %v213 = vld [vmem:[%s1 + $0x30] sm:$0xff]
      %v214 = vld [vmem:[%s1 + $0x38] sm:$0xff]
      %v215 = vld [vmem:[%s1 + $0x40] sm:$0xff]
      %v216 = vld [vmem:[%s1 + $0x48] sm:$0xff]
      %v217 = vld [vmem:[%s1 + $0x50] sm:$0xff]
      %v218 = vld [vmem:[%s1 + $0x58] sm:$0xff]
      %v219 = vld [vmem:[%s1 + $0x60] sm:$0xff]
      %v220 = vld [vmem:[%s1 + $0x68] sm:$0xff]
      %v221 = vld [vmem:[%s1 + $0x70] sm:$0xff]
      %v222 = vld [vmem:[%s1 + $0x78] sm:$0xff]
      %vm239 = vcmask 1046528
      %v240 = vrot.slane %v189, 1
      %v241 = vrot.slane %v190, 1
      %v242 = vsel %vm239, %v240, %v241
      %v243 = vrot.slane %v191, 1
      %v244 = vrot.slane %v192, 1
      %v245 = vsel %vm239, %v243, %v244
      %v246 = vrot.slane %v193, 1
      %v247 = vrot.slane %v194, 1
      %v248 = vsel %vm239, %v246, %v247
      %v249 = vrot.slane %v195, 1
      %v250 = vrot.slane %v196, 1
      %v251 = vsel %vm239, %v249, %v250
      %v252 = vrot.slane %v197, 1
      %v253 = vrot.slane %v198, 1
      %v254 = vsel %vm239, %v252, %v253
      %v255 = vrot.slane %v199, 1
      %v256 = vrot.slane %v200, 1
      %v257 = vsel %vm239, %v255, %v256
      %v258 = vrot.slane %v201, 1
      %v259 = vrot.slane %v202, 1
      %v260 = vsel %vm239, %v258, %v259
      %v261 = vrot.slane %v203, 1
      %v262 = vrot.slane %v204, 1
      %v263 = vsel %vm239, %v261, %v262
      %s272 = scalar_lea.vmem %s1, 128
      %v273 = vld [vmem:[%s272] sm:$0xff]
      %v274 = vld [vmem:[%s272 + $0x8] sm:$0xff]
      %v275 = vld [vmem:[%s272 + $0x10] sm:$0xff]
      %v276 = vld [vmem:[%s272 + $0x18] sm:$0xff]
      %v277 = vld [vmem:[%s272 + $0x20] sm:$0xff]
      %v278 = vld [vmem:[%s272 + $0x28] sm:$0xff]
      %v279 = vld [vmem:[%s272 + $0x30] sm:$0xff]
      %v280 = vld [vmem:[%s272 + $0x38] sm:$0xff]
      %v281 = vld [vmem:[%s272 + $0x40] sm:$0xff]
      %v282 = vld [vmem:[%s272 + $0x48] sm:$0xff]
      %v283 = vld [vmem:[%s272 + $0x50] sm:$0xff]
      %v284 = vld [vmem:[%s272 + $0x58] sm:$0xff]
      %v285 = vld [vmem:[%s272 + $0x60] sm:$0xff]
      %v286 = vld [vmem:[%s272 + $0x68] sm:$0xff]
      %v287 = vld [vmem:[%s272 + $0x70] sm:$0xff]
      %v288 = vld [vmem:[%s272 + $0x78] sm:$0xff]
      %289 = vmatprep.subr.mxu0 0.0
      %290 = vmatpush1.msra.mxu0 %v288
      %291 = vmatprep.subr.mxu0 0.0
      %292 = vmatpush1.msra.mxu0 %v287
      %293 = vmatprep.subr.mxu0 0.0
      %294 = vmatpush1.msra.mxu0 %v286
      %295 = vmatprep.subr.mxu0 0.0
      %296 = vmatpush1.msra.mxu0 %v285
      %297 = vmatprep.subr.mxu0 0.0
      %298 = vmatpush1.msra.mxu0 %v284
      %299 = vmatprep.subr.mxu0 0.0
      %300 = vmatpush1.msra.mxu0 %v283
      %301 = vmatprep.subr.mxu0 0.0
      %302 = vmatpush1.msra.mxu0 %v282
      %303 = vmatprep.subr.mxu0 0.0
      %304 = vmatpush1.msra.mxu0 %v281
      %305 = vmatprep.subr.mxu0 0.0
      %306 = vmatpush1.msra.mxu0 %v280
      %307 = vmatprep.subr.mxu0 0.0
      %308 = vmatpush1.msra.mxu0 %v279
      %309 = vmatprep.subr.mxu0 0.0
      %310 = vmatpush1.msra.mxu0 %v278
      %311 = vmatprep.subr.mxu0 0.0
      %312 = vmatpush1.msra.mxu0 %v277
      %313 = vmatprep.subr.mxu0 0.0
      %314 = vmatpush1.msra.mxu0 %v276
      %315 = vmatprep.subr.mxu0 0.0
      %316 = vmatpush1.msra.mxu0 %v275
      %317 = vmatprep.subr.mxu0 0.0
      %318 = vmatpush1.msra.mxu0 %v274
      %319 = vmatprep.subr.mxu0 0.0
      %320 = vmatpush1.msra.mxu0 %v273
      %321 = vmatprep.subr.mxu0 0.0
      %322 = vmatpush2.msra.mxu0 0.0
      %323 = vmatprep.subr.mxu0 0.0
      %324 = vmatpush2.msra.mxu0 0.0
      %325 = vmatprep.subr.mxu0 0.0
      %326 = vmatpush2.msra.mxu0 0.0
      %327 = vmatprep.subr.mxu0 0.0
      %328 = vmatpush2.msra.mxu0 0.0
      %329 = vmatprep.subr.mxu0 0.0
      %330 = vmatpush2.msra.mxu0 0.0
      %331 = vmatprep.subr.mxu0 0.0
      %332 = vmatpush2.msra.mxu0 0.0
      %333 = vmatprep.subr.mxu0 0.0
      %334 = vmatpush2.msra.mxu0 0.0
      %335 = vmatprep.subr.mxu0 0.0
      %336 = vmatpush2.msra.mxu0 0.0
      %337 = vmatprep.subr.mxu0 0.0
      %338 = vmatpush2.msra.mxu0 0.0
      %339 = vmatprep.subr.mxu0 0.0
      %340 = vmatpush2.msra.mxu0 0.0
      %341 = vmatprep.subr.mxu0 0.0
      %342 = vmatpush2.msra.mxu0 0.0
      %343 = vmatprep.subr.mxu0 0.0
      %344 = vmatpush2.msra.mxu0 0.0
      %345 = vmatprep.subr.mxu0 0.0
      %346 = vmatpush2.msra.mxu0 0.0
      %347 = vmatprep.subr.mxu0 0.0
      %348 = vmatpush2.msra.mxu0 0.0
      %349 = vmatprep.subr.mxu0 0.0
      %350 = vmatpush2.msra.mxu0 0.0
      %351 = vmatprep.subr.mxu0 0.0
      %352 = vmatpush2.msra.mxu0 0.0
      %353 = vmatprep.mubr.f32.mxu0 0.0
      %354 = vmatmul.mubr.f32.gmra.mxu0 %v242
      %v355 = vpop.f32.mrf.mxu0
      %v356 = vadd.f32 0.0, %v355
      %v357 = vpop.f32.mrf.mxu0
      %358 = vmatprep.mubr.f32.mxu0 0.0
      %359 = vmatmul.mubr.f32.gmra.mxu0 %v245
      %v360 = vpop.f32.mrf.mxu0
      %v361 = vadd.f32 0.0, %v360
      %v362 = vpop.f32.mrf.mxu0
      %363 = vmatprep.mubr.f32.mxu0 0.0
      %364 = vmatmul.mubr.f32.gmra.mxu0 %v248
      %v365 = vpop.f32.mrf.mxu0
      %v366 = vadd.f32 0.0, %v365
      %v367 = vpop.f32.mrf.mxu0
      %368 = vmatprep.mubr.f32.mxu0 0.0
      %369 = vmatmul.mubr.f32.gmra.mxu0 %v251
      %v370 = vpop.f32.mrf.mxu0
      %v371 = vadd.f32 0.0, %v370
      %v372 = vpop.f32.mrf.mxu0
      %373 = vmatprep.mubr.f32.mxu0 0.0
      %374 = vmatmul.mubr.f32.gmra.mxu0 %v254
      %v375 = vpop.f32.mrf.mxu0
      %v376 = vadd.f32 0.0, %v375
      %v377 = vpop.f32.mrf.mxu0
      %378 = vmatprep.mubr.f32.mxu0 0.0
      %379 = vmatmul.mubr.f32.gmra.mxu0 %v257
      %v380 = vpop.f32.mrf.mxu0
      %v381 = vadd.f32 0.0, %v380
      %v382 = vpop.f32.mrf.mxu0
      %383 = vmatprep.mubr.f32.mxu0 0.0
      %384 = vmatmul.mubr.f32.gmra.mxu0 %v260
      %v385 = vpop.f32.mrf.mxu0
      %v386 = vadd.f32 0.0, %v385
      %v387 = vpop.f32.mrf.mxu0
      %388 = vmatprep.mubr.f32.mxu0 0.0
      %389 = vmatmul.mubr.f32.gmra.mxu0 %v263
      %v390 = vpop.f32.mrf.mxu0
      %v391 = vadd.f32 0.0, %v390
      %v392 = vpop.f32.mrf.mxu0
      %393 = vdwg.mxu0
      %394 = vmatprep.subr.mxu0 0.0
      %395 = vmatpush1.msra.mxu0 %v222
      %396 = vmatprep.subr.mxu0 0.0
      %397 = vmatpush1.msra.mxu0 %v221
      %398 = vmatprep.subr.mxu0 0.0
      %399 = vmatpush1.msra.mxu0 %v220
      %400 = vmatprep.subr.mxu0 0.0
      %401 = vmatpush1.msra.mxu0 %v219
      %402 = vmatprep.subr.mxu0 0.0
      %403 = vmatpush1.msra.mxu0 %v218
      %404 = vmatprep.subr.mxu0 0.0
      %405 = vmatpush1.msra.mxu0 %v217
      %406 = vmatprep.subr.mxu0 0.0
      %407 = vmatpush1.msra.mxu0 %v216
      %408 = vmatprep.subr.mxu0 0.0
      %409 = vmatpush1.msra.mxu0 %v215
      %410 = vmatprep.subr.mxu0 0.0
      %411 = vmatpush1.msra.mxu0 %v214
      %412 = vmatprep.subr.mxu0 0.0
      %413 = vmatpush1.msra.mxu0 %v213
      %414 = vmatprep.subr.mxu0 0.0
      %415 = vmatpush1.msra.mxu0 %v212
      %416 = vmatprep.subr.mxu0 0.0
      %417 = vmatpush1.msra.mxu0 %v211
      %418 = vmatprep.subr.mxu0 0.0
      %419 = vmatpush1.msra.mxu0 %v210
      %420 = vmatprep.subr.mxu0 0.0
      %421 = vmatpush1.msra.mxu0 %v209
      %422 = vmatprep.subr.mxu0 0.0
      %423 = vmatpush1.msra.mxu0 %v208
      %424 = vmatprep.subr.mxu0 0.0
      %425 = vmatpush1.msra.mxu0 %v207
      %426 = vmatprep.subr.mxu0 0.0
      %427 = vmatpush2.msra.mxu0 0.0
      %428 = vmatprep.subr.mxu0 0.0
      %429 = vmatpush2.msra.mxu0 0.0
      %430 = vmatprep.subr.mxu0 0.0
      %431 = vmatpush2.msra.mxu0 0.0
      %432 = vmatprep.subr.mxu0 0.0
      %433 = vmatpush2.msra.mxu0 0.0
      %434 = vmatprep.subr.mxu0 0.0
      %435 = vmatpush2.msra.mxu0 0.0
      %436 = vmatprep.subr.mxu0 0.0
      %437 = vmatpush2.msra.mxu0 0.0
      %438 = vmatprep.subr.mxu0 0.0
      %439 = vmatpush2.msra.mxu0 0.0
      %440 = vmatprep.subr.mxu0 0.0
      %441 = vmatpush2.msra.mxu0 0.0
      %442 = vmatprep.subr.mxu0 0.0
      %443 = vmatpush2.msra.mxu0 0.0
      %444 = vmatprep.subr.mxu0 0.0
      %445 = vmatpush2.msra.mxu0 0.0
      %446 = vmatprep.subr.mxu0 0.0
      %447 = vmatpush2.msra.mxu0 0.0
      %448 = vmatprep.subr.mxu0 0.0
      %449 = vmatpush2.msra.mxu0 0.0
      %450 = vmatprep.subr.mxu0 0.0
      %451 = vmatpush2.msra.mxu0 0.0
      %452 = vmatprep.subr.mxu0 0.0
      %453 = vmatpush2.msra.mxu0 0.0
      %454 = vmatprep.subr.mxu0 0.0
      %455 = vmatpush2.msra.mxu0 0.0
      %456 = vmatprep.subr.mxu0 0.0
      %457 = vmatpush2.msra.mxu0 0.0
      %458 = vmatprep.mubr.f32.mxu0 0.0
      %459 = vmatmul.mubr.f32.gmra.mxu0 %v189
      %v460 = vpop.f32.mrf.mxu0
      %v461 = vadd.f32 %v356, %v460
      %v462 = vpop.f32.mrf.mxu0
      %463 = vmatprep.mubr.f32.mxu0 0.0
      %464 = vmatmul.mubr.f32.gmra.mxu0 %v191
      %v465 = vpop.f32.mrf.mxu0
      %v466 = vadd.f32 %v361, %v465
      %v467 = vpop.f32.mrf.mxu0
      %468 = vmatprep.mubr.f32.mxu0 0.0
      %469 = vmatmul.mubr.f32.gmra.mxu0 %v193
      %v470 = vpop.f32.mrf.mxu0
      %v471 = vadd.f32 %v366, %v470
      %v472 = vpop.f32.mrf.mxu0
      %473 = vmatprep.mubr.f32.mxu0 0.0
      %474 = vmatmul.mubr.f32.gmra.mxu0 %v195
      %v475 = vpop.f32.mrf.mxu0
      %v476 = vadd.f32 %v371, %v475
      %v477 = vpop.f32.mrf.mxu0
      %478 = vmatprep.mubr.f32.mxu0 0.0
      %479 = vmatmul.mubr.f32.gmra.mxu0 %v197
      %v480 = vpop.f32.mrf.mxu0
      %v481 = vadd.f32 %v376, %v480
      %v482 = vpop.f32.mrf.mxu0
      %483 = vmatprep.mubr.f32.mxu0 0.0
      %484 = vmatmul.mubr.f32.gmra.mxu0 %v199
      %v485 = vpop.f32.mrf.mxu0
      %v486 = vadd.f32 %v381, %v485
      %v487 = vpop.f32.mrf.mxu0
      %488 = vmatprep.mubr.f32.mxu0 0.0
      %489 = vmatmul.mubr.f32.gmra.mxu0 %v201
      %v490 = vpop.f32.mrf.mxu0
      %v491 = vadd.f32 %v386, %v490
      %v492 = vpop.f32.mrf.mxu0
      %493 = vmatprep.mubr.f32.mxu0 0.0
      %494 = vmatmul.mubr.f32.gmra.mxu0 %v203
      %v495 = vpop.f32.mrf.mxu0
      %v496 = vadd.f32 %v391, %v495
      %v497 = vpop.f32.mrf.mxu0
      %498 = vdwg.mxu0
      %s499 = scalar_lea.vmem %s1, 256
      %v500 = vld [vmem:[%s499] sm:$0xff]
      %v501 = vld [vmem:[%s499 + $0x8] sm:$0xff]
      %v502 = vld [vmem:[%s499 + $0x10] sm:$0xff]
      %v503 = vld [vmem:[%s499 + $0x18] sm:$0xff]
      %v504 = vld [vmem:[%s499 + $0x20] sm:$0xff]
      %v505 = vld [vmem:[%s499 + $0x28] sm:$0xff]
      %v506 = vld [vmem:[%s499 + $0x30] sm:$0xff]
      %v507 = vld [vmem:[%s499 + $0x38] sm:$0xff]
      %v508 = vld [vmem:[%s499 + $0x40] sm:$0xff]
      %v509 = vld [vmem:[%s499 + $0x48] sm:$0xff]
      %v510 = vld [vmem:[%s499 + $0x50] sm:$0xff]
      %v511 = vld [vmem:[%s499 + $0x58] sm:$0xff]
      %v512 = vld [vmem:[%s499 + $0x60] sm:$0xff]
      %v513 = vld [vmem:[%s499 + $0x68] sm:$0xff]
      %v514 = vld [vmem:[%s499 + $0x70] sm:$0xff]
      %v515 = vld [vmem:[%s499 + $0x78] sm:$0xff]
      %516 = vmatprep.subr.mxu0 0.0
      %517 = vmatpush1.msra.mxu0 %v515
      %518 = vmatprep.subr.mxu0 0.0
      %519 = vmatpush1.msra.mxu0 %v514
      %520 = vmatprep.subr.mxu0 0.0
      %521 = vmatpush1.msra.mxu0 %v513
      %522 = vmatprep.subr.mxu0 0.0
      %523 = vmatpush1.msra.mxu0 %v512
      %524 = vmatprep.subr.mxu0 0.0
      %525 = vmatpush1.msra.mxu0 %v511
      %526 = vmatprep.subr.mxu0 0.0
      %527 = vmatpush1.msra.mxu0 %v510
      %528 = vmatprep.subr.mxu0 0.0
      %529 = vmatpush1.msra.mxu0 %v509
      %530 = vmatprep.subr.mxu0 0.0
      %531 = vmatpush1.msra.mxu0 %v508
      %532 = vmatprep.subr.mxu0 0.0
      %533 = vmatpush1.msra.mxu0 %v507
      %534 = vmatprep.subr.mxu0 0.0
      %535 = vmatpush1.msra.mxu0 %v506
      %536 = vmatprep.subr.mxu0 0.0
      %537 = vmatpush1.msra.mxu0 %v505
      %538 = vmatprep.subr.mxu0 0.0
      %539 = vmatpush1.msra.mxu0 %v504
      %540 = vmatprep.subr.mxu0 0.0
      %541 = vmatpush1.msra.mxu0 %v503
      %542 = vmatprep.subr.mxu0 0.0
      %543 = vmatpush1.msra.mxu0 %v502
      %544 = vmatprep.subr.mxu0 0.0
      %545 = vmatpush1.msra.mxu0 %v501
      %546 = vmatprep.subr.mxu0 0.0
      %547 = vmatpush1.msra.mxu0 %v500
      %548 = vmatprep.subr.mxu0 0.0
      %549 = vmatpush2.msra.mxu0 0.0
      %550 = vmatprep.subr.mxu0 0.0
      %551 = vmatpush2.msra.mxu0 0.0
      %552 = vmatprep.subr.mxu0 0.0
      %553 = vmatpush2.msra.mxu0 0.0
      %554 = vmatprep.subr.mxu0 0.0
      %555 = vmatpush2.msra.mxu0 0.0
      %556 = vmatprep.subr.mxu0 0.0
      %557 = vmatpush2.msra.mxu0 0.0
      %558 = vmatprep.subr.mxu0 0.0
      %559 = vmatpush2.msra.mxu0 0.0
      %560 = vmatprep.subr.mxu0 0.0
      %561 = vmatpush2.msra.mxu0 0.0
      %562 = vmatprep.subr.mxu0 0.0
      %563 = vmatpush2.msra.mxu0 0.0
      %564 = vmatprep.subr.mxu0 0.0
      %565 = vmatpush2.msra.mxu0 0.0
      %566 = vmatprep.subr.mxu0 0.0
      %567 = vmatpush2.msra.mxu0 0.0
      %568 = vmatprep.subr.mxu0 0.0
      %569 = vmatpush2.msra.mxu0 0.0
      %570 = vmatprep.subr.mxu0 0.0
      %571 = vmatpush2.msra.mxu0 0.0
      %572 = vmatprep.subr.mxu0 0.0
      %573 = vmatpush2.msra.mxu0 0.0
      %574 = vmatprep.subr.mxu0 0.0
      %575 = vmatpush2.msra.mxu0 0.0
      %576 = vmatprep.subr.mxu0 0.0
      %577 = vmatpush2.msra.mxu0 0.0
      %578 = vmatprep.subr.mxu0 0.0
      %579 = vmatpush2.msra.mxu0 0.0
      %580 = vmatprep.mubr.f32.mxu0 0.0
      %581 = vmatmul.mubr.f32.gmra.mxu0 %v191
      %v582 = vpop.f32.mrf.mxu0
      %v583 = vadd.f32 0.0, %v582
      %v584 = vpop.f32.mrf.mxu0
      %585 = vmatprep.mubr.f32.mxu0 0.0
      %586 = vmatmul.mubr.f32.gmra.mxu0 %v193
      %v587 = vpop.f32.mrf.mxu0
      %v588 = vadd.f32 0.0, %v587
      %v589 = vpop.f32.mrf.mxu0
      %590 = vmatprep.mubr.f32.mxu0 0.0
      %591 = vmatmul.mubr.f32.gmra.mxu0 %v195
      %v592 = vpop.f32.mrf.mxu0
      %v593 = vadd.f32 0.0, %v592
      %v594 = vpop.f32.mrf.mxu0
      %595 = vmatprep.mubr.f32.mxu0 0.0
      %596 = vmatmul.mubr.f32.gmra.mxu0 %v197
      %v597 = vpop.f32.mrf.mxu0
      %v598 = vadd.f32 0.0, %v597
      %v599 = vpop.f32.mrf.mxu0
      %600 = vmatprep.mubr.f32.mxu0 0.0
      %601 = vmatmul.mubr.f32.gmra.mxu0 %v199
      %v602 = vpop.f32.mrf.mxu0
      %v603 = vadd.f32 0.0, %v602
      %v604 = vpop.f32.mrf.mxu0
      %605 = vmatprep.mubr.f32.mxu0 0.0
      %606 = vmatmul.mubr.f32.gmra.mxu0 %v201
      %v607 = vpop.f32.mrf.mxu0
      %v608 = vadd.f32 0.0, %v607
      %v609 = vpop.f32.mrf.mxu0
      %610 = vmatprep.mubr.f32.mxu0 0.0
      %611 = vmatmul.mubr.f32.gmra.mxu0 %v203
      %v612 = vpop.f32.mrf.mxu0
      %v613 = vadd.f32 0.0, %v612
      %v614 = vpop.f32.mrf.mxu0
      %615 = vmatprep.mubr.f32.mxu0 0.0
      %616 = vmatmul.mubr.f32.gmra.mxu0 %v205
      %v617 = vpop.f32.mrf.mxu0
      %v618 = vadd.f32 0.0, %v617
      %v619 = vpop.f32.mrf.mxu0
      %620 = vdwg.mxu0
      %v621 = vadd.f32 %v461, %v583
      %v622 = vadd.f32 %v466, %v588
      %v623 = vadd.f32 %v471, %v593
      %v624 = vadd.f32 %v476, %v598
      %v625 = vadd.f32 %v481, %v603
      %v626 = vadd.f32 %v486, %v608
      %v627 = vadd.f32 %v491, %v613
      %v628 = vadd.f32 %v496, %v618
      %v631 = vrot.slane %v205, 1
      %v632 = vrot.slane %v206, 1
      %v633 = vsel %vm239, %v631, %v632
      %s635 = scalar_lea.vmem %s1, 384
      %v636 = vld [vmem:[%s635] sm:$0xff]
      %v637 = vld [vmem:[%s635 + $0x8] sm:$0xff]
      %v638 = vld [vmem:[%s635 + $0x10] sm:$0xff]
      %v639 = vld [vmem:[%s635 + $0x18] sm:$0xff]
      %v640 = vld [vmem:[%s635 + $0x20] sm:$0xff]
      %v641 = vld [vmem:[%s635 + $0x28] sm:$0xff]
      %v642 = vld [vmem:[%s635 + $0x30] sm:$0xff]
      %v643 = vld [vmem:[%s635 + $0x38] sm:$0xff]
      %v644 = vld [vmem:[%s635 + $0x40] sm:$0xff]
      %v645 = vld [vmem:[%s635 + $0x48] sm:$0xff]
      %v646 = vld [vmem:[%s635 + $0x50] sm:$0xff]
      %v647 = vld [vmem:[%s635 + $0x58] sm:$0xff]
      %v648 = vld [vmem:[%s635 + $0x60] sm:$0xff]
      %v649 = vld [vmem:[%s635 + $0x68] sm:$0xff]
      %v650 = vld [vmem:[%s635 + $0x70] sm:$0xff]
      %v651 = vld [vmem:[%s635 + $0x78] sm:$0xff]
      %652 = vmatprep.subr.mxu0 0.0
      %653 = vmatpush1.msra.mxu0 %v651
      %654 = vmatprep.subr.mxu0 0.0
      %655 = vmatpush1.msra.mxu0 %v650
      %656 = vmatprep.subr.mxu0 0.0
      %657 = vmatpush1.msra.mxu0 %v649
      %658 = vmatprep.subr.mxu0 0.0
      %659 = vmatpush1.msra.mxu0 %v648
      %660 = vmatprep.subr.mxu0 0.0
      %661 = vmatpush1.msra.mxu0 %v647
      %662 = vmatprep.subr.mxu0 0.0
      %663 = vmatpush1.msra.mxu0 %v646
      %664 = vmatprep.subr.mxu0 0.0
      %665 = vmatpush1.msra.mxu0 %v645
      %666 = vmatprep.subr.mxu0 0.0
      %667 = vmatpush1.msra.mxu0 %v644
      %668 = vmatprep.subr.mxu0 0.0
      %669 = vmatpush1.msra.mxu0 %v643
      %670 = vmatprep.subr.mxu0 0.0
      %671 = vmatpush1.msra.mxu0 %v642
      %672 = vmatprep.subr.mxu0 0.0
      %673 = vmatpush1.msra.mxu0 %v641
      %674 = vmatprep.subr.mxu0 0.0
      %675 = vmatpush1.msra.mxu0 %v640
      %676 = vmatprep.subr.mxu0 0.0
      %677 = vmatpush1.msra.mxu0 %v639
      %678 = vmatprep.subr.mxu0 0.0
      %679 = vmatpush1.msra.mxu0 %v638
      %680 = vmatprep.subr.mxu0 0.0
      %681 = vmatpush1.msra.mxu0 %v637
      %682 = vmatprep.subr.mxu0 0.0
      %683 = vmatpush1.msra.mxu0 %v636
      %684 = vmatprep.subr.mxu0 0.0
      %685 = vmatpush2.msra.mxu0 0.0
      %686 = vmatprep.subr.mxu0 0.0
      %687 = vmatpush2.msra.mxu0 0.0
      %688 = vmatprep.subr.mxu0 0.0
      %689 = vmatpush2.msra.mxu0 0.0
      %690 = vmatprep.subr.mxu0 0.0
      %691 = vmatpush2.msra.mxu0 0.0
      %692 = vmatprep.subr.mxu0 0.0
      %693 = vmatpush2.msra.mxu0 0.0
      %694 = vmatprep.subr.mxu0 0.0
      %695 = vmatpush2.msra.mxu0 0.0
      %696 = vmatprep.subr.mxu0 0.0
      %697 = vmatpush2.msra.mxu0 0.0
      %698 = vmatprep.subr.mxu0 0.0
      %699 = vmatpush2.msra.mxu0 0.0
      %700 = vmatprep.subr.mxu0 0.0
      %701 = vmatpush2.msra.mxu0 0.0
      %702 = vmatprep.subr.mxu0 0.0
      %703 = vmatpush2.msra.mxu0 0.0
      %704 = vmatprep.subr.mxu0 0.0
      %705 = vmatpush2.msra.mxu0 0.0
      %706 = vmatprep.subr.mxu0 0.0
      %707 = vmatpush2.msra.mxu0 0.0
      %708 = vmatprep.subr.mxu0 0.0
      %709 = vmatpush2.msra.mxu0 0.0
      %710 = vmatprep.subr.mxu0 0.0
      %711 = vmatpush2.msra.mxu0 0.0
      %712 = vmatprep.subr.mxu0 0.0
      %713 = vmatpush2.msra.mxu0 0.0
      %714 = vmatprep.subr.mxu0 0.0
      %715 = vmatpush2.msra.mxu0 0.0
      %716 = vmatprep.mubr.f32.mxu0 0.0
      %717 = vmatmul.mubr.f32.gmra.mxu0 %v245
      %v718 = vpop.f32.mrf.mxu0
      %v719 = vadd.f32 0.0, %v718
      %v720 = vpop.f32.mrf.mxu0
      %721 = vmatprep.mubr.f32.mxu0 0.0
      %722 = vmatmul.mubr.f32.gmra.mxu0 %v248
      %v723 = vpop.f32.mrf.mxu0
      %v724 = vadd.f32 0.0, %v723
      %v725 = vpop.f32.mrf.mxu0
      %726 = vmatprep.mubr.f32.mxu0 0.0
      %727 = vmatmul.mubr.f32.gmra.mxu0 %v251
      %v728 = vpop.f32.mrf.mxu0
      %v729 = vadd.f32 0.0, %v728
      %v730 = vpop.f32.mrf.mxu0
      %731 = vmatprep.mubr.f32.mxu0 0.0
      %732 = vmatmul.mubr.f32.gmra.mxu0 %v254
      %v733 = vpop.f32.mrf.mxu0
      %v734 = vadd.f32 0.0, %v733
      %v735 = vpop.f32.mrf.mxu0
      %736 = vmatprep.mubr.f32.mxu0 0.0
      %737 = vmatmul.mubr.f32.gmra.mxu0 %v257
      %v738 = vpop.f32.mrf.mxu0
      %v739 = vadd.f32 0.0, %v738
      %v740 = vpop.f32.mrf.mxu0
      %741 = vmatprep.mubr.f32.mxu0 0.0
      %742 = vmatmul.mubr.f32.gmra.mxu0 %v260
      %v743 = vpop.f32.mrf.mxu0
      %v744 = vadd.f32 0.0, %v743
      %v745 = vpop.f32.mrf.mxu0
      %746 = vmatprep.mubr.f32.mxu0 0.0
      %747 = vmatmul.mubr.f32.gmra.mxu0 %v263
      %v748 = vpop.f32.mrf.mxu0
      %v749 = vadd.f32 0.0, %v748
      %v750 = vpop.f32.mrf.mxu0
      %751 = vmatprep.mubr.f32.mxu0 0.0
      %752 = vmatmul.mubr.f32.gmra.mxu0 %v633
      %v753 = vpop.f32.mrf.mxu0
      %v754 = vadd.f32 0.0, %v753
      %v755 = vpop.f32.mrf.mxu0
      %756 = vdwg.mxu0
      %v757 = vadd.f32 %v621, %v719
      %v758 = vadd.f32 %v622, %v724
      %v759 = vadd.f32 %v623, %v729
      %v760 = vadd.f32 %v624, %v734
      %v761 = vadd.f32 %v625, %v739
      %v762 = vadd.f32 %v626, %v744
      %v763 = vadd.f32 %v627, %v749
      %v764 = vadd.f32 %v628, %v754
      %v765 = vadd.f32 %v757, %v758
      %v766 = vadd.f32 %v765, %v759
      %v767 = vadd.f32 %v766, %v760
      %v768 = vadd.f32 %v767, %v761
      %v769 = vadd.f32 %v768, %v762
      %v770 = vadd.f32 %v769, %v763
      %v771 = vadd.f32 %v770, %v764
      %v772 = vrot.slane %v771, 4
      %v773 = vadd.f32 %v771, %v772
      %v774 = vrot.slane %v773, 2
      %v775 = vadd.f32 %v773, %v774
      %v776 = vrot.slane %v775, 1
      %v777 = vadd.f32 %v775, %v776
      %v778 = vmul.f32 %v777, 0.015625
      %v779 = vsub.f32 %v757, %v778
      %v780 = vsub.f32 %v758, %v778
      %v781 = vsub.f32 %v759, %v778
      %v782 = vsub.f32 %v760, %v778
      %v783 = vsub.f32 %v761, %v778
      %v784 = vsub.f32 %v762, %v778
      %v785 = vsub.f32 %v763, %v778
      %v786 = vsub.f32 %v764, %v778
      %v787 = vmul.f32 %v779, %v779
      %v788 = vmul.f32 %v780, %v780
      %v789 = vmul.f32 %v781, %v781
      %v790 = vmul.f32 %v782, %v782
      %v791 = vmul.f32 %v783, %v783
      %v792 = vmul.f32 %v784, %v784
      %v793 = vmul.f32 %v785, %v785
      %v794 = vmul.f32 %v786, %v786
      %v795 = vadd.f32 %v787, %v788
      %v796 = vadd.f32 %v795, %v789
      %v797 = vadd.f32 %v796, %v790
      %v798 = vadd.f32 %v797, %v791
      %v799 = vadd.f32 %v798, %v792
      %v800 = vadd.f32 %v799, %v793
      %v801 = vadd.f32 %v800, %v794
      %v802 = vrot.slane %v801, 4
      %v803 = vadd.f32 %v801, %v802
      %v804 = vrot.slane %v803, 2
      %v805 = vadd.f32 %v803, %v804
      %v806 = vrot.slane %v805, 1
      %v807 = vadd.f32 %v805, %v806
      %v808 = vmul.f32 %v807, 0.015625
      %v809 = vadd.f32 %v808, 1e-05
      %v810 = vrsqrt.pop %v809
      %v811 = vmul.f32 %v779, %v810
      %v812 = vmul.f32 %v780, %v810
      %v813 = vmul.f32 %v781, %v810
      %v814 = vmul.f32 %v782, %v810
      %v815 = vmul.f32 %v783, %v810
      %v816 = vmul.f32 %v784, %v810
      %v817 = vmul.f32 %v785, %v810
      %v818 = vmul.f32 %v786, %v810
      %v819 = vxor.u32 %v811, 2147483648
      %v820 = vxor.u32 %v812, 2147483648
      %v821 = vxor.u32 %v813, 2147483648
      %v822 = vxor.u32 %v814, 2147483648
      %v823 = vxor.u32 %v815, 2147483648
      %v824 = vxor.u32 %v816, 2147483648
      %v825 = vxor.u32 %v817, 2147483648
      %v826 = vxor.u32 %v818, 2147483648
      %v827 = vmul.f32 %v819, 1.442695
      %v828 = vpow.pop %v827
      %v829 = vmul.f32 %v820, 1.442695
      %v830 = vpow.pop %v829
      %v831 = vmul.f32 %v821, 1.442695
      %v832 = vpow.pop %v831
      %v833 = vmul.f32 %v822, 1.442695
      %v834 = vpow.pop %v833
      %v835 = vmul.f32 %v823, 1.442695
      %v836 = vpow.pop %v835
      %v837 = vmul.f32 %v824, 1.442695
      %v838 = vpow.pop %v837
      %v839 = vmul.f32 %v825, 1.442695
      %v840 = vpow.pop %v839
      %v841 = vmul.f32 %v826, 1.442695
      %v842 = vpow.pop %v841
      %v843 = vadd.f32 %v828, 1.0
      %v844 = vadd.f32 %v830, 1.0
      %v845 = vadd.f32 %v832, 1.0
      %v846 = vadd.f32 %v834, 1.0
      %v847 = vadd.f32 %v836, 1.0
      %v848 = vadd.f32 %v838, 1.0
      %v849 = vadd.f32 %v840, 1.0
      %v850 = vadd.f32 %v842, 1.0
      %v851 = vrcp.pop %v843
      %v852 = vmul.f32 1.0, %v851
      %v853 = vrcp.pop %v844
      %v854 = vmul.f32 1.0, %v853
      %v855 = vrcp.pop %v845
      %v856 = vmul.f32 1.0, %v855
      %v857 = vrcp.pop %v846
      %v858 = vmul.f32 1.0, %v857
      %v859 = vrcp.pop %v847
      %v860 = vmul.f32 1.0, %v859
      %v861 = vrcp.pop %v848
      %v862 = vmul.f32 1.0, %v861
      %v863 = vrcp.pop %v849
      %v864 = vmul.f32 1.0, %v863
      %v865 = vrcp.pop %v850
      %v866 = vmul.f32 1.0, %v865
      %v867 = vmul.f32 %v811, %v852
      %v868 = vmul.f32 %v812, %v854
      %v869 = vmul.f32 %v813, %v856
      %v870 = vmul.f32 %v814, %v858
      %v871 = vmul.f32 %v815, %v860
      %v872 = vmul.f32 %v816, %v862
      %v873 = vmul.f32 %v817, %v864
      %v874 = vmul.f32 %v818, %v866
      %875 = vst [vmem:[#allocation2] sm:$0xff] 0.0
      %876 = vst [vmem:[#allocation2 + $0x8] sm:$0x3] 0.0
      %877 = vst [vmem:[#allocation2 + $0x10] sm:$0xff] 0.0
      %878 = vst [vmem:[#allocation2 + $0x18] sm:$0x3] 0.0
      %879 = vst [vmem:[#allocation2 + $0x20] sm:$0xff] 0.0
      %880 = vst [vmem:[#allocation2 + $0x28] sm:$0x3] 0.0
      %881 = vst [vmem:[#allocation2 + $0x30] sm:$0xff] 0.0
      %882 = vst [vmem:[#allocation2 + $0x38] sm:$0x3] 0.0
      %883 = vst [vmem:[#allocation2 + $0x40] sm:$0xff] 0.0
      %884 = vst [vmem:[#allocation2 + $0x48] sm:$0x3] 0.0
      %885 = vst [vmem:[#allocation2 + $0x50] sm:$0xff] 0.0
      %886 = vst [vmem:[#allocation2 + $0x58] sm:$0x3] 0.0
      %887 = vst [vmem:[#allocation2 + $0x60] sm:$0xff] 0.0
      %888 = vst [vmem:[#allocation2 + $0x68] sm:$0x3] 0.0
      %889 = vst [vmem:[#allocation2 + $0x70] sm:$0xff] 0.0
      %890 = vst [vmem:[#allocation2 + $0x78] sm:$0x3] 0.0
      %891 = vst [vmem:[#allocation2 + $0x80] sm:$0xff] 0.0
      %892 = vst [vmem:[#allocation2 + $0x88] sm:$0x3] 0.0
      %893 = vst [vmem:[#allocation2 + $0x90] sm:$0xff] 0.0
      %894 = vst [vmem:[#allocation2 + $0x98] sm:$0x3] 0.0
      %s895 = scalar_lea.vmem [#allocation2], 16
      %896 = vst [vmem:[%s895 + $0x1] sm:$0xff] %v867
      %897 = vst [vmem:[%s895 + $0x11] sm:$0xff] %v868
      %898 = vst [vmem:[%s895 + $0x21] sm:$0xff] %v869
      %899 = vst [vmem:[%s895 + $0x31] sm:$0xff] %v870
      %900 = vst [vmem:[%s895 + $0x41] sm:$0xff] %v871
      %901 = vst [vmem:[%s895 + $0x51] sm:$0xff] %v872
      %902 = vst [vmem:[%s895 + $0x61] sm:$0xff] %v873
      %903 = vst [vmem:[%s895 + $0x71] sm:$0xff] %v874
      %v904 = vld [vmem:[#allocation2] sm:$0xff]
      %v905 = vld [vmem:[#allocation2 + $0x10] sm:$0xff]
      %v906 = vld [vmem:[#allocation2 + $0x20] sm:$0xff]
      %v907 = vld [vmem:[#allocation2 + $0x30] sm:$0xff]
      %v908 = vld [vmem:[#allocation2 + $0x40] sm:$0xff]
      %v909 = vld [vmem:[#allocation2 + $0x50] sm:$0xff]
      %v910 = vld [vmem:[#allocation2 + $0x60] sm:$0xff]
      %v911 = vld [vmem:[#allocation2 + $0x70] sm:$0xff]
      %v912 = vld [vmem:[%s2] sm:$0xff]
      %v913 = vld [vmem:[%s2 + $0x8] sm:$0xff]
      %v914 = vld [vmem:[%s2 + $0x10] sm:$0xff]
      %v915 = vld [vmem:[%s2 + $0x18] sm:$0xff]
      %v916 = vld [vmem:[%s2 + $0x20] sm:$0xff]
      %v917 = vld [vmem:[%s2 + $0x28] sm:$0xff]
      %v918 = vld [vmem:[%s2 + $0x30] sm:$0xff]
      %v919 = vld [vmem:[%s2 + $0x38] sm:$0xff]
      %v920 = vld [vmem:[%s2 + $0x40] sm:$0xff]
      %v921 = vld [vmem:[%s2 + $0x48] sm:$0xff]
      %v922 = vld [vmem:[%s2 + $0x50] sm:$0xff]
      %v923 = vld [vmem:[%s2 + $0x58] sm:$0xff]
      %v924 = vld [vmem:[%s2 + $0x60] sm:$0xff]
      %v925 = vld [vmem:[%s2 + $0x68] sm:$0xff]
      %v926 = vld [vmem:[%s2 + $0x70] sm:$0xff]
      %v927 = vld [vmem:[%s2 + $0x78] sm:$0xff]
      %v928 = vld [vmem:[#allocation2 + $0x1] sm:$0xff]
      %v929 = vld [vmem:[#allocation2 + $0x11] sm:$0xff]
      %v930 = vld [vmem:[#allocation2 + $0x21] sm:$0xff]
      %v931 = vld [vmem:[#allocation2 + $0x31] sm:$0xff]
      %v932 = vld [vmem:[#allocation2 + $0x41] sm:$0xff]
      %v933 = vld [vmem:[#allocation2 + $0x51] sm:$0xff]
      %v934 = vld [vmem:[#allocation2 + $0x61] sm:$0xff]
      %v935 = vld [vmem:[#allocation2 + $0x71] sm:$0xff]
      %s936 = scalar_lea.vmem %s2, 128
      %v937 = vld [vmem:[%s936] sm:$0xff]
      %v938 = vld [vmem:[%s936 + $0x8] sm:$0xff]
      %v939 = vld [vmem:[%s936 + $0x10] sm:$0xff]
      %v940 = vld [vmem:[%s936 + $0x18] sm:$0xff]
      %v941 = vld [vmem:[%s936 + $0x20] sm:$0xff]
      %v942 = vld [vmem:[%s936 + $0x28] sm:$0xff]
      %v943 = vld [vmem:[%s936 + $0x30] sm:$0xff]
      %v944 = vld [vmem:[%s936 + $0x38] sm:$0xff]
      %v945 = vld [vmem:[%s936 + $0x40] sm:$0xff]
      %v946 = vld [vmem:[%s936 + $0x48] sm:$0xff]
      %v947 = vld [vmem:[%s936 + $0x50] sm:$0xff]
      %v948 = vld [vmem:[%s936 + $0x58] sm:$0xff]
      %v949 = vld [vmem:[%s936 + $0x60] sm:$0xff]
      %v950 = vld [vmem:[%s936 + $0x68] sm:$0xff]
      %v951 = vld [vmem:[%s936 + $0x70] sm:$0xff]
      %v952 = vld [vmem:[%s936 + $0x78] sm:$0xff]
      %953 = vmatprep.subr.mxu0 0.0
      %954 = vmatpush1.msra.mxu0 %v952
      %955 = vmatprep.subr.mxu0 0.0
      %956 = vmatpush1.msra.mxu0 %v951
      %957 = vmatprep.subr.mxu0 0.0
      %958 = vmatpush1.msra.mxu0 %v950
      %959 = vmatprep.subr.mxu0 0.0
      %960 = vmatpush1.msra.mxu0 %v949
      %961 = vmatprep.subr.mxu0 0.0
      %962 = vmatpush1.msra.mxu0 %v948
      %963 = vmatprep.subr.mxu0 0.0
      %964 = vmatpush1.msra.mxu0 %v947
      %965 = vmatprep.subr.mxu0 0.0
      %966 = vmatpush1.msra.mxu0 %v946
      %967 = vmatprep.subr.mxu0 0.0
      %968 = vmatpush1.msra.mxu0 %v945
      %969 = vmatprep.subr.mxu0 0.0
      %970 = vmatpush1.msra.mxu0 %v944
      %971 = vmatprep.subr.mxu0 0.0
      %972 = vmatpush1.msra.mxu0 %v943
      %973 = vmatprep.subr.mxu0 0.0
      %974 = vmatpush1.msra.mxu0 %v942
      %975 = vmatprep.subr.mxu0 0.0
      %976 = vmatpush1.msra.mxu0 %v941
      %977 = vmatprep.subr.mxu0 0.0
      %978 = vmatpush1.msra.mxu0 %v940
      %979 = vmatprep.subr.mxu0 0.0
      %980 = vmatpush1.msra.mxu0 %v939
      %981 = vmatprep.subr.mxu0 0.0
      %982 = vmatpush1.msra.mxu0 %v938
      %983 = vmatprep.subr.mxu0 0.0
      %984 = vmatpush1.msra.mxu0 %v937
      %985 = vmatprep.subr.mxu0 0.0
      %986 = vmatpush2.msra.mxu0 0.0
      %987 = vmatprep.subr.mxu0 0.0
      %988 = vmatpush2.msra.mxu0 0.0
      %989 = vmatprep.subr.mxu0 0.0
      %990 = vmatpush2.msra.mxu0 0.0
      %991 = vmatprep.subr.mxu0 0.0
      %992 = vmatpush2.msra.mxu0 0.0
      %993 = vmatprep.subr.mxu0 0.0
      %994 = vmatpush2.msra.mxu0 0.0
      %995 = vmatprep.subr.mxu0 0.0
      %996 = vmatpush2.msra.mxu0 0.0
      %997 = vmatprep.subr.mxu0 0.0
      %998 = vmatpush2.msra.mxu0 0.0
      %999 = vmatprep.subr.mxu0 0.0
      %1000 = vmatpush2.msra.mxu0 0.0
      %1001 = vmatprep.subr.mxu0 0.0
      %1002 = vmatpush2.msra.mxu0 0.0
      %1003 = vmatprep.subr.mxu0 0.0
      %1004 = vmatpush2.msra.mxu0 0.0
      %1005 = vmatprep.subr.mxu0 0.0
      %1006 = vmatpush2.msra.mxu0 0.0
      %1007 = vmatprep.subr.mxu0 0.0
      %1008 = vmatpush2.msra.mxu0 0.0
      %1009 = vmatprep.subr.mxu0 0.0
      %1010 = vmatpush2.msra.mxu0 0.0
      %1011 = vmatprep.subr.mxu0 0.0
      %1012 = vmatpush2.msra.mxu0 0.0
      %1013 = vmatprep.subr.mxu0 0.0
      %1014 = vmatpush2.msra.mxu0 0.0
      %1015 = vmatprep.subr.mxu0 0.0
      %1016 = vmatpush2.msra.mxu0 0.0
      %1017 = vmatprep.mubr.f32.mxu0 0.0
      %1018 = vmatmul.mubr.f32.gmra.mxu0 %v928
      %v1019 = vpop.f32.mrf.mxu0
      %v1020 = vadd.f32 0.0, %v1019
      %v1021 = vpop.f32.mrf.mxu0
      %1022 = vmatprep.mubr.f32.mxu0 0.0
      %1023 = vmatmul.mubr.f32.gmra.mxu0 %v929
      %v1024 = vpop.f32.mrf.mxu0
      %v1025 = vadd.f32 0.0, %v1024
      %v1026 = vpop.f32.mrf.mxu0
      %1027 = vmatprep.mubr.f32.mxu0 0.0
      %1028 = vmatmul.mubr.f32.gmra.mxu0 %v930
      %v1029 = vpop.f32.mrf.mxu0
      %v1030 = vadd.f32 0.0, %v1029
      %v1031 = vpop.f32.mrf.mxu0
      %1032 = vmatprep.mubr.f32.mxu0 0.0
      %1033 = vmatmul.mubr.f32.gmra.mxu0 %v931
      %v1034 = vpop.f32.mrf.mxu0
      %v1035 = vadd.f32 0.0, %v1034
      %v1036 = vpop.f32.mrf.mxu0
      %1037 = vmatprep.mubr.f32.mxu0 0.0
      %1038 = vmatmul.mubr.f32.gmra.mxu0 %v932
      %v1039 = vpop.f32.mrf.mxu0
      %v1040 = vadd.f32 0.0, %v1039
      %v1041 = vpop.f32.mrf.mxu0
      %1042 = vmatprep.mubr.f32.mxu0 0.0
      %1043 = vmatmul.mubr.f32.gmra.mxu0 %v933
      %v1044 = vpop.f32.mrf.mxu0
      %v1045 = vadd.f32 0.0, %v1044
      %v1046 = vpop.f32.mrf.mxu0
      %1047 = vmatprep.mubr.f32.mxu0 0.0
      %1048 = vmatmul.mubr.f32.gmra.mxu0 %v934
      %v1049 = vpop.f32.mrf.mxu0
      %v1050 = vadd.f32 0.0, %v1049
      %v1051 = vpop.f32.mrf.mxu0
      %1052 = vmatprep.mubr.f32.mxu0 0.0
      %1053 = vmatmul.mubr.f32.gmra.mxu0 %v935
      %v1054 = vpop.f32.mrf.mxu0
      %v1055 = vadd.f32 0.0, %v1054
      %v1056 = vpop.f32.mrf.mxu0
      %1057 = vdwg.mxu0
      %1058 = vmatprep.subr.mxu0 0.0
      %1059 = vmatpush1.msra.mxu0 %v927
      %1060 = vmatprep.subr.mxu0 0.0
      %1061 = vmatpush1.msra.mxu0 %v926
      %1062 = vmatprep.subr.mxu0 0.0
      %1063 = vmatpush1.msra.mxu0 %v925
      %1064 = vmatprep.subr.mxu0 0.0
      %1065 = vmatpush1.msra.mxu0 %v924
      %1066 = vmatprep.subr.mxu0 0.0
      %1067 = vmatpush1.msra.mxu0 %v923
      %1068 = vmatprep.subr.mxu0 0.0
      %1069 = vmatpush1.msra.mxu0 %v922
      %1070 = vmatprep.subr.mxu0 0.0
      %1071 = vmatpush1.msra.mxu0 %v921
      %1072 = vmatprep.subr.mxu0 0.0
      %1073 = vmatpush1.msra.mxu0 %v920
      %1074 = vmatprep.subr.mxu0 0.0
      %1075 = vmatpush1.msra.mxu0 %v919
      %1076 = vmatprep.subr.mxu0 0.0
      %1077 = vmatpush1.msra.mxu0 %v918
      %1078 = vmatprep.subr.mxu0 0.0
      %1079 = vmatpush1.msra.mxu0 %v917
      %1080 = vmatprep.subr.mxu0 0.0
      %1081 = vmatpush1.msra.mxu0 %v916
      %1082 = vmatprep.subr.mxu0 0.0
      %1083 = vmatpush1.msra.mxu0 %v915
      %1084 = vmatprep.subr.mxu0 0.0
      %1085 = vmatpush1.msra.mxu0 %v914
      %1086 = vmatprep.subr.mxu0 0.0
      %1087 = vmatpush1.msra.mxu0 %v913
      %1088 = vmatprep.subr.mxu0 0.0
      %1089 = vmatpush1.msra.mxu0 %v912
      %1090 = vmatprep.subr.mxu0 0.0
      %1091 = vmatpush2.msra.mxu0 0.0
      %1092 = vmatprep.subr.mxu0 0.0
      %1093 = vmatpush2.msra.mxu0 0.0
      %1094 = vmatprep.subr.mxu0 0.0
      %1095 = vmatpush2.msra.mxu0 0.0
      %1096 = vmatprep.subr.mxu0 0.0
      %1097 = vmatpush2.msra.mxu0 0.0
      %1098 = vmatprep.subr.mxu0 0.0
      %1099 = vmatpush2.msra.mxu0 0.0
      %1100 = vmatprep.subr.mxu0 0.0
      %1101 = vmatpush2.msra.mxu0 0.0
      %1102 = vmatprep.subr.mxu0 0.0
      %1103 = vmatpush2.msra.mxu0 0.0
      %1104 = vmatprep.subr.mxu0 0.0
      %1105 = vmatpush2.msra.mxu0 0.0
      %1106 = vmatprep.subr.mxu0 0.0
      %1107 = vmatpush2.msra.mxu0 0.0
      %1108 = vmatprep.subr.mxu0 0.0
      %1109 = vmatpush2.msra.mxu0 0.0
      %1110 = vmatprep.subr.mxu0 0.0
      %1111 = vmatpush2.msra.mxu0 0.0
      %1112 = vmatprep.subr.mxu0 0.0
      %1113 = vmatpush2.msra.mxu0 0.0
      %1114 = vmatprep.subr.mxu0 0.0
      %1115 = vmatpush2.msra.mxu0 0.0
      %1116 = vmatprep.subr.mxu0 0.0
      %1117 = vmatpush2.msra.mxu0 0.0
      %1118 = vmatprep.subr.mxu0 0.0
      %1119 = vmatpush2.msra.mxu0 0.0
      %1120 = vmatprep.subr.mxu0 0.0
      %1121 = vmatpush2.msra.mxu0 0.0
      %1122 = vmatprep.mubr.f32.mxu0 0.0
      %1123 = vmatmul.mubr.f32.gmra.mxu0 %v904
      %v1124 = vpop.f32.mrf.mxu0
      %v1125 = vadd.f32 %v1020, %v1124
      %v1126 = vpop.f32.mrf.mxu0
      %1127 = vmatprep.mubr.f32.mxu0 0.0
      %1128 = vmatmul.mubr.f32.gmra.mxu0 %v905
      %v1129 = vpop.f32.mrf.mxu0
      %v1130 = vadd.f32 %v1025, %v1129
      %v1131 = vpop.f32.mrf.mxu0
      %1132 = vmatprep.mubr.f32.mxu0 0.0
      %1133 = vmatmul.mubr.f32.gmra.mxu0 %v906
      %v1134 = vpop.f32.mrf.mxu0
      %v1135 = vadd.f32 %v1030, %v1134
      %v1136 = vpop.f32.mrf.mxu0
      %1137 = vmatprep.mubr.f32.mxu0 0.0
      %1138 = vmatmul.mubr.f32.gmra.mxu0 %v907
      %v1139 = vpop.f32.mrf.mxu0
      %v1140 = vadd.f32 %v1035, %v1139
      %v1141 = vpop.f32.mrf.mxu0
      %1142 = vmatprep.mubr.f32.mxu0 0.0
      %1143 = vmatmul.mubr.f32.gmra.mxu0 %v908
      %v1144 = vpop.f32.mrf.mxu0
      %v1145 = vadd.f32 %v1040, %v1144
      %v1146 = vpop.f32.mrf.mxu0
      %1147 = vmatprep.mubr.f32.mxu0 0.0
      %1148 = vmatmul.mubr.f32.gmra.mxu0 %v909
      %v1149 = vpop.f32.mrf.mxu0
      %v1150 = vadd.f32 %v1045, %v1149
      %v1151 = vpop.f32.mrf.mxu0
      %1152 = vmatprep.mubr.f32.mxu0 0.0
      %1153 = vmatmul.mubr.f32.gmra.mxu0 %v910
      %v1154 = vpop.f32.mrf.mxu0
      %v1155 = vadd.f32 %v1050, %v1154
      %v1156 = vpop.f32.mrf.mxu0
      %1157 = vmatprep.mubr.f32.mxu0 0.0
      %1158 = vmatmul.mubr.f32.gmra.mxu0 %v911
      %v1159 = vpop.f32.mrf.mxu0
      %v1160 = vadd.f32 %v1055, %v1159
      %v1161 = vpop.f32.mrf.mxu0
      %1162 = vdwg.mxu0
      %v1163 = vld [vmem:[#allocation2 + $0x2] sm:$0xff]
      %v1164 = vld [vmem:[#allocation2 + $0x12] sm:$0xff]
      %v1165 = vld [vmem:[#allocation2 + $0x22] sm:$0xff]
      %v1166 = vld [vmem:[#allocation2 + $0x32] sm:$0xff]
      %v1167 = vld [vmem:[#allocation2 + $0x42] sm:$0xff]
      %v1168 = vld [vmem:[#allocation2 + $0x52] sm:$0xff]
      %v1169 = vld [vmem:[#allocation2 + $0x62] sm:$0xff]
      %v1170 = vld [vmem:[#allocation2 + $0x72] sm:$0xff]
      %s1171 = scalar_lea.vmem %s2, 256
      %v1172 = vld [vmem:[%s1171] sm:$0xff]
      %v1173 = vld [vmem:[%s1171 + $0x8] sm:$0xff]
      %v1174 = vld [vmem:[%s1171 + $0x10] sm:$0xff]
      %v1175 = vld [vmem:[%s1171 + $0x18] sm:$0xff]
      %v1176 = vld [vmem:[%s1171 + $0x20] sm:$0xff]
      %v1177 = vld [vmem:[%s1171 + $0x28] sm:$0xff]
      %v1178 = vld [vmem:[%s1171 + $0x30] sm:$0xff]
      %v1179 = vld [vmem:[%s1171 + $0x38] sm:$0xff]
      %v1180 = vld [vmem:[%s1171 + $0x40] sm:$0xff]
      %v1181 = vld [vmem:[%s1171 + $0x48] sm:$0xff]
      %v1182 = vld [vmem:[%s1171 + $0x50] sm:$0xff]
      %v1183 = vld [vmem:[%s1171 + $0x58] sm:$0xff]
      %v1184 = vld [vmem:[%s1171 + $0x60] sm:$0xff]
      %v1185 = vld [vmem:[%s1171 + $0x68] sm:$0xff]
      %v1186 = vld [vmem:[%s1171 + $0x70] sm:$0xff]
      %v1187 = vld [vmem:[%s1171 + $0x78] sm:$0xff]
      %1188 = vmatprep.subr.mxu0 0.0
      %1189 = vmatpush1.msra.mxu0 %v1187
      %1190 = vmatprep.subr.mxu0 0.0
      %1191 = vmatpush1.msra.mxu0 %v1186
      %1192 = vmatprep.subr.mxu0 0.0
      %1193 = vmatpush1.msra.mxu0 %v1185
      %1194 = vmatprep.subr.mxu0 0.0
      %1195 = vmatpush1.msra.mxu0 %v1184
      %1196 = vmatprep.subr.mxu0 0.0
      %1197 = vmatpush1.msra.mxu0 %v1183
      %1198 = vmatprep.subr.mxu0 0.0
      %1199 = vmatpush1.msra.mxu0 %v1182
      %1200 = vmatprep.subr.mxu0 0.0
      %1201 = vmatpush1.msra.mxu0 %v1181
      %1202 = vmatprep.subr.mxu0 0.0
      %1203 = vmatpush1.msra.mxu0 %v1180
      %1204 = vmatprep.subr.mxu0 0.0
      %1205 = vmatpush1.msra.mxu0 %v1179
      %1206 = vmatprep.subr.mxu0 0.0
      %1207 = vmatpush1.msra.mxu0 %v1178
      %1208 = vmatprep.subr.mxu0 0.0
      %1209 = vmatpush1.msra.mxu0 %v1177
      %1210 = vmatprep.subr.mxu0 0.0
      %1211 = vmatpush1.msra.mxu0 %v1176
      %1212 = vmatprep.subr.mxu0 0.0
      %1213 = vmatpush1.msra.mxu0 %v1175
      %1214 = vmatprep.subr.mxu0 0.0
      %1215 = vmatpush1.msra.mxu0 %v1174
      %1216 = vmatprep.subr.mxu0 0.0
      %1217 = vmatpush1.msra.mxu0 %v1173
      %1218 = vmatprep.subr.mxu0 0.0
      %1219 = vmatpush1.msra.mxu0 %v1172
      %1220 = vmatprep.subr.mxu0 0.0
      %1221 = vmatpush2.msra.mxu0 0.0
      %1222 = vmatprep.subr.mxu0 0.0
      %1223 = vmatpush2.msra.mxu0 0.0
      %1224 = vmatprep.subr.mxu0 0.0
      %1225 = vmatpush2.msra.mxu0 0.0
      %1226 = vmatprep.subr.mxu0 0.0
      %1227 = vmatpush2.msra.mxu0 0.0
      %1228 = vmatprep.subr.mxu0 0.0
      %1229 = vmatpush2.msra.mxu0 0.0
      %1230 = vmatprep.subr.mxu0 0.0
      %1231 = vmatpush2.msra.mxu0 0.0
      %1232 = vmatprep.subr.mxu0 0.0
      %1233 = vmatpush2.msra.mxu0 0.0
      %1234 = vmatprep.subr.mxu0 0.0
      %1235 = vmatpush2.msra.mxu0 0.0
      %1236 = vmatprep.subr.mxu0 0.0
      %1237 = vmatpush2.msra.mxu0 0.0
      %1238 = vmatprep.subr.mxu0 0.0
      %1239 = vmatpush2.msra.mxu0 0.0
      %1240 = vmatprep.subr.mxu0 0.0
      %1241 = vmatpush2.msra.mxu0 0.0
      %1242 = vmatprep.subr.mxu0 0.0
      %1243 = vmatpush2.msra.mxu0 0.0
      %1244 = vmatprep.subr.mxu0 0.0
      %1245 = vmatpush2.msra.mxu0 0.0
      %1246 = vmatprep.subr.mxu0 0.0
      %1247 = vmatpush2.msra.mxu0 0.0
      %1248 = vmatprep.subr.mxu0 0.0
      %1249 = vmatpush2.msra.mxu0 0.0
      %1250 = vmatprep.subr.mxu0 0.0
      %1251 = vmatpush2.msra.mxu0 0.0
      %1252 = vmatprep.mubr.f32.mxu0 0.0
      %1253 = vmatmul.mubr.f32.gmra.mxu0 %v1163
      %v1254 = vpop.f32.mrf.mxu0
      %v1255 = vadd.f32 0.0, %v1254
      %v1256 = vpop.f32.mrf.mxu0
      %1257 = vmatprep.mubr.f32.mxu0 0.0
      %1258 = vmatmul.mubr.f32.gmra.mxu0 %v1164
      %v1259 = vpop.f32.mrf.mxu0
      %v1260 = vadd.f32 0.0, %v1259
      %v1261 = vpop.f32.mrf.mxu0
      %1262 = vmatprep.mubr.f32.mxu0 0.0
      %1263 = vmatmul.mubr.f32.gmra.mxu0 %v1165
      %v1264 = vpop.f32.mrf.mxu0
      %v1265 = vadd.f32 0.0, %v1264
      %v1266 = vpop.f32.mrf.mxu0
      %1267 = vmatprep.mubr.f32.mxu0 0.0
      %1268 = vmatmul.mubr.f32.gmra.mxu0 %v1166
      %v1269 = vpop.f32.mrf.mxu0
      %v1270 = vadd.f32 0.0, %v1269
      %v1271 = vpop.f32.mrf.mxu0
      %1272 = vmatprep.mubr.f32.mxu0 0.0
      %1273 = vmatmul.mubr.f32.gmra.mxu0 %v1167
      %v1274 = vpop.f32.mrf.mxu0
      %v1275 = vadd.f32 0.0, %v1274
      %v1276 = vpop.f32.mrf.mxu0
      %1277 = vmatprep.mubr.f32.mxu0 0.0
      %1278 = vmatmul.mubr.f32.gmra.mxu0 %v1168
      %v1279 = vpop.f32.mrf.mxu0
      %v1280 = vadd.f32 0.0, %v1279
      %v1281 = vpop.f32.mrf.mxu0
      %1282 = vmatprep.mubr.f32.mxu0 0.0
      %1283 = vmatmul.mubr.f32.gmra.mxu0 %v1169
      %v1284 = vpop.f32.mrf.mxu0
      %v1285 = vadd.f32 0.0, %v1284
      %v1286 = vpop.f32.mrf.mxu0
      %1287 = vmatprep.mubr.f32.mxu0 0.0
      %1288 = vmatmul.mubr.f32.gmra.mxu0 %v1170
      %v1289 = vpop.f32.mrf.mxu0
      %v1290 = vadd.f32 0.0, %v1289
      %v1291 = vpop.f32.mrf.mxu0
      %1292 = vdwg.mxu0
      %v1293 = vadd.f32 %v1125, %v1255
      %v1294 = vadd.f32 %v1130, %v1260
      %v1295 = vadd.f32 %v1135, %v1265
      %v1296 = vadd.f32 %v1140, %v1270
      %v1297 = vadd.f32 %v1145, %v1275
      %v1298 = vadd.f32 %v1150, %v1280
      %v1299 = vadd.f32 %v1155, %v1285
      %v1300 = vadd.f32 %v1160, %v1290
      %v1301 = vld [vmem:[%s895] sm:$0xff]
      %v1302 = vld [vmem:[%s895 + $0x10] sm:$0xff]
      %v1303 = vld [vmem:[%s895 + $0x20] sm:$0xff]
      %v1304 = vld [vmem:[%s895 + $0x30] sm:$0xff]
      %v1305 = vld [vmem:[%s895 + $0x40] sm:$0xff]
      %v1306 = vld [vmem:[%s895 + $0x50] sm:$0xff]
      %v1307 = vld [vmem:[%s895 + $0x60] sm:$0xff]
      %v1308 = vld [vmem:[%s895 + $0x70] sm:$0xff]
      %s1309 = scalar_lea.vmem %s2, 384
      %v1310 = vld [vmem:[%s1309] sm:$0xff]
      %v1311 = vld [vmem:[%s1309 + $0x8] sm:$0xff]
      %v1312 = vld [vmem:[%s1309 + $0x10] sm:$0xff]
      %v1313 = vld [vmem:[%s1309 + $0x18] sm:$0xff]
      %v1314 = vld [vmem:[%s1309 + $0x20] sm:$0xff]
      %v1315 = vld [vmem:[%s1309 + $0x28] sm:$0xff]
      %v1316 = vld [vmem:[%s1309 + $0x30] sm:$0xff]
      %v1317 = vld [vmem:[%s1309 + $0x38] sm:$0xff]
      %v1318 = vld [vmem:[%s1309 + $0x40] sm:$0xff]
      %v1319 = vld [vmem:[%s1309 + $0x48] sm:$0xff]
      %v1320 = vld [vmem:[%s1309 + $0x50] sm:$0xff]
      %v1321 = vld [vmem:[%s1309 + $0x58] sm:$0xff]
      %v1322 = vld [vmem:[%s1309 + $0x60] sm:$0xff]
      %v1323 = vld [vmem:[%s1309 + $0x68] sm:$0xff]
      %v1324 = vld [vmem:[%s1309 + $0x70] sm:$0xff]
      %v1325 = vld [vmem:[%s1309 + $0x78] sm:$0xff]
      %1326 = vmatprep.subr.mxu0 0.0
      %1327 = vmatpush1.msra.mxu0 %v1325
      %1328 = vmatprep.subr.mxu0 0.0
      %1329 = vmatpush1.msra.mxu0 %v1324
      %1330 = vmatprep.subr.mxu0 0.0
      %1331 = vmatpush1.msra.mxu0 %v1323
      %1332 = vmatprep.subr.mxu0 0.0
      %1333 = vmatpush1.msra.mxu0 %v1322
      %1334 = vmatprep.subr.mxu0 0.0
      %1335 = vmatpush1.msra.mxu0 %v1321
      %1336 = vmatprep.subr.mxu0 0.0
      %1337 = vmatpush1.msra.mxu0 %v1320
      %1338 = vmatprep.subr.mxu0 0.0
      %1339 = vmatpush1.msra.mxu0 %v1319
      %1340 = vmatprep.subr.mxu0 0.0
      %1341 = vmatpush1.msra.mxu0 %v1318
      %1342 = vmatprep.subr.mxu0 0.0
      %1343 = vmatpush1.msra.mxu0 %v1317
      %1344 = vmatprep.subr.mxu0 0.0
      %1345 = vmatpush1.msra.mxu0 %v1316
      %1346 = vmatprep.subr.mxu0 0.0
      %1347 = vmatpush1.msra.mxu0 %v1315
      %1348 = vmatprep.subr.mxu0 0.0
      %1349 = vmatpush1.msra.mxu0 %v1314
      %1350 = vmatprep.subr.mxu0 0.0
      %1351 = vmatpush1.msra.mxu0 %v1313
      %1352 = vmatprep.subr.mxu0 0.0
      %1353 = vmatpush1.msra.mxu0 %v1312
      %1354 = vmatprep.subr.mxu0 0.0
      %1355 = vmatpush1.msra.mxu0 %v1311
      %1356 = vmatprep.subr.mxu0 0.0
      %1357 = vmatpush1.msra.mxu0 %v1310
      %1358 = vmatprep.subr.mxu0 0.0
      %1359 = vmatpush2.msra.mxu0 0.0
      %1360 = vmatprep.subr.mxu0 0.0
      %1361 = vmatpush2.msra.mxu0 0.0
      %1362 = vmatprep.subr.mxu0 0.0
      %1363 = vmatpush2.msra.mxu0 0.0
      %1364 = vmatprep.subr.mxu0 0.0
      %1365 = vmatpush2.msra.mxu0 0.0
      %1366 = vmatprep.subr.mxu0 0.0
      %1367 = vmatpush2.msra.mxu0 0.0
      %1368 = vmatprep.subr.mxu0 0.0
      %1369 = vmatpush2.msra.mxu0 0.0
      %1370 = vmatprep.subr.mxu0 0.0
      %1371 = vmatpush2.msra.mxu0 0.0
      %1372 = vmatprep.subr.mxu0 0.0
      %1373 = vmatpush2.msra.mxu0 0.0
      %1374 = vmatprep.subr.mxu0 0.0
      %1375 = vmatpush2.msra.mxu0 0.0
      %1376 = vmatprep.subr.mxu0 0.0
      %1377 = vmatpush2.msra.mxu0 0.0
      %1378 = vmatprep.subr.mxu0 0.0
      %1379 = vmatpush2.msra.mxu0 0.0
      %1380 = vmatprep.subr.mxu0 0.0
      %1381 = vmatpush2.msra.mxu0 0.0
      %1382 = vmatprep.subr.mxu0 0.0
      %1383 = vmatpush2.msra.mxu0 0.0
      %1384 = vmatprep.subr.mxu0 0.0
      %1385 = vmatpush2.msra.mxu0 0.0
      %1386 = vmatprep.subr.mxu0 0.0
      %1387 = vmatpush2.msra.mxu0 0.0
      %1388 = vmatprep.subr.mxu0 0.0
      %1389 = vmatpush2.msra.mxu0 0.0
      %1390 = vmatprep.mubr.f32.mxu0 0.0
      %1391 = vmatmul.mubr.f32.gmra.mxu0 %v1301
      %v1392 = vpop.f32.mrf.mxu0
      %v1393 = vadd.f32 0.0, %v1392
      %v1394 = vpop.f32.mrf.mxu0
      %1395 = vmatprep.mubr.f32.mxu0 0.0
      %1396 = vmatmul.mubr.f32.gmra.mxu0 %v1302
      %v1397 = vpop.f32.mrf.mxu0
      %v1398 = vadd.f32 0.0, %v1397
      %v1399 = vpop.f32.mrf.mxu0
      %1400 = vmatprep.mubr.f32.mxu0 0.0
      %1401 = vmatmul.mubr.f32.gmra.mxu0 %v1303
      %v1402 = vpop.f32.mrf.mxu0
      %v1403 = vadd.f32 0.0, %v1402
      %v1404 = vpop.f32.mrf.mxu0
      %1405 = vmatprep.mubr.f32.mxu0 0.0
      %1406 = vmatmul.mubr.f32.gmra.mxu0 %v1304
      %v1407 = vpop.f32.mrf.mxu0
      %v1408 = vadd.f32 0.0, %v1407
      %v1409 = vpop.f32.mrf.mxu0
      %1410 = vmatprep.mubr.f32.mxu0 0.0
      %1411 = vmatmul.mubr.f32.gmra.mxu0 %v1305
      %v1412 = vpop.f32.mrf.mxu0
      %v1413 = vadd.f32 0.0, %v1412
      %v1414 = vpop.f32.mrf.mxu0
      %1415 = vmatprep.mubr.f32.mxu0 0.0
      %1416 = vmatmul.mubr.f32.gmra.mxu0 %v1306
      %v1417 = vpop.f32.mrf.mxu0
      %v1418 = vadd.f32 0.0, %v1417
      %v1419 = vpop.f32.mrf.mxu0
      %1420 = vmatprep.mubr.f32.mxu0 0.0
      %1421 = vmatmul.mubr.f32.gmra.mxu0 %v1307
      %v1422 = vpop.f32.mrf.mxu0
      %v1423 = vadd.f32 0.0, %v1422
      %v1424 = vpop.f32.mrf.mxu0
      %1425 = vmatprep.mubr.f32.mxu0 0.0
      %1426 = vmatmul.mubr.f32.gmra.mxu0 %v1308
      %v1427 = vpop.f32.mrf.mxu0
      %v1428 = vadd.f32 0.0, %v1427
      %v1429 = vpop.f32.mrf.mxu0
      %1430 = vdwg.mxu0
      %v1431 = vadd.f32 %v1293, %v1393
      %v1432 = vadd.f32 %v1294, %v1398
      %v1433 = vadd.f32 %v1295, %v1403
      %v1434 = vadd.f32 %v1296, %v1408
      %v1435 = vadd.f32 %v1297, %v1413
      %v1436 = vadd.f32 %v1298, %v1418
      %v1437 = vadd.f32 %v1299, %v1423
      %v1438 = vadd.f32 %v1300, %v1428
      %v1439 = vld [vmem:[%s895 + $0x1] sm:$0xff]
      %v1440 = vld [vmem:[%s895 + $0x11] sm:$0xff]
      %v1441 = vld [vmem:[%s895 + $0x21] sm:$0xff]
      %v1442 = vld [vmem:[%s895 + $0x31] sm:$0xff]
      %v1443 = vld [vmem:[%s895 + $0x41] sm:$0xff]
      %v1444 = vld [vmem:[%s895 + $0x51] sm:$0xff]
      %v1445 = vld [vmem:[%s895 + $0x61] sm:$0xff]
      %v1446 = vld [vmem:[%s895 + $0x71] sm:$0xff]
      %s1447 = scalar_lea.vmem %s2, 512
      %v1448 = vld [vmem:[%s1447] sm:$0xff]
      %v1449 = vld [vmem:[%s1447 + $0x8] sm:$0xff]
      %v1450 = vld [vmem:[%s1447 + $0x10] sm:$0xff]
      %v1451 = vld [vmem:[%s1447 + $0x18] sm:$0xff]
      %v1452 = vld [vmem:[%s1447 + $0x20] sm:$0xff]
      %v1453 = vld [vmem:[%s1447 + $0x28] sm:$0xff]
      %v1454 = vld [vmem:[%s1447 + $0x30] sm:$0xff]
      %v1455 = vld [vmem:[%s1447 + $0x38] sm:$0xff]
      %v1456 = vld [vmem:[%s1447 + $0x40] sm:$0xff]
      %v1457 = vld [vmem:[%s1447 + $0x48] sm:$0xff]
      %v1458 = vld [vmem:[%s1447 + $0x50] sm:$0xff]
      %v1459 = vld [vmem:[%s1447 + $0x58] sm:$0xff]
      %v1460 = vld [vmem:[%s1447 + $0x60] sm:$0xff]
      %v1461 = vld [vmem:[%s1447 + $0x68] sm:$0xff]
      %v1462 = vld [vmem:[%s1447 + $0x70] sm:$0xff]
      %v1463 = vld [vmem:[%s1447 + $0x78] sm:$0xff]
      %1464 = vmatprep.subr.mxu0 0.0
      %1465 = vmatpush1.msra.mxu0 %v1463
      %1466 = vmatprep.subr.mxu0 0.0
      %1467 = vmatpush1.msra.mxu0 %v1462
      %1468 = vmatprep.subr.mxu0 0.0
      %1469 = vmatpush1.msra.mxu0 %v1461
      %1470 = vmatprep.subr.mxu0 0.0
      %1471 = vmatpush1.msra.mxu0 %v1460
      %1472 = vmatprep.subr.mxu0 0.0
      %1473 = vmatpush1.msra.mxu0 %v1459
      %1474 = vmatprep.subr.mxu0 0.0
      %1475 = vmatpush1.msra.mxu0 %v1458
      %1476 = vmatprep.subr.mxu0 0.0
      %1477 = vmatpush1.msra.mxu0 %v1457
      %1478 = vmatprep.subr.mxu0 0.0
      %1479 = vmatpush1.msra.mxu0 %v1456
      %1480 = vmatprep.subr.mxu0 0.0
      %1481 = vmatpush1.msra.mxu0 %v1455
      %1482 = vmatprep.subr.mxu0 0.0
      %1483 = vmatpush1.msra.mxu0 %v1454
      %1484 = vmatprep.subr.mxu0 0.0
      %1485 = vmatpush1.msra.mxu0 %v1453
      %1486 = vmatprep.subr.mxu0 0.0
      %1487 = vmatpush1.msra.mxu0 %v1452
      %1488 = vmatprep.subr.mxu0 0.0
      %1489 = vmatpush1.msra.mxu0 %v1451
      %1490 = vmatprep.subr.mxu0 0.0
      %1491 = vmatpush1.msra.mxu0 %v1450
      %1492 = vmatprep.subr.mxu0 0.0
      %1493 = vmatpush1.msra.mxu0 %v1449
      %1494 = vmatprep.subr.mxu0 0.0
      %1495 = vmatpush1.msra.mxu0 %v1448
      %1496 = vmatprep.subr.mxu0 0.0
      %1497 = vmatpush2.msra.mxu0 0.0
      %1498 = vmatprep.subr.mxu0 0.0
      %1499 = vmatpush2.msra.mxu0 0.0
      %1500 = vmatprep.subr.mxu0 0.0
      %1501 = vmatpush2.msra.mxu0 0.0
      %1502 = vmatprep.subr.mxu0 0.0
      %1503 = vmatpush2.msra.mxu0 0.0
      %1504 = vmatprep.subr.mxu0 0.0
      %1505 = vmatpush2.msra.mxu0 0.0
      %1506 = vmatprep.subr.mxu0 0.0
      %1507 = vmatpush2.msra.mxu0 0.0
      %1508 = vmatprep.subr.mxu0 0.0
      %1509 = vmatpush2.msra.mxu0 0.0
      %1510 = vmatprep.subr.mxu0 0.0
      %1511 = vmatpush2.msra.mxu0 0.0
      %1512 = vmatprep.subr.mxu0 0.0
      %1513 = vmatpush2.msra.mxu0 0.0
      %1514 = vmatprep.subr.mxu0 0.0
      %1515 = vmatpush2.msra.mxu0 0.0
      %1516 = vmatprep.subr.mxu0 0.0
      %1517 = vmatpush2.msra.mxu0 0.0
      %1518 = vmatprep.subr.mxu0 0.0
      %1519 = vmatpush2.msra.mxu0 0.0
      %1520 = vmatprep.subr.mxu0 0.0
      %1521 = vmatpush2.msra.mxu0 0.0
      %1522 = vmatprep.subr.mxu0 0.0
      %1523 = vmatpush2.msra.mxu0 0.0
      %1524 = vmatprep.subr.mxu0 0.0
      %1525 = vmatpush2.msra.mxu0 0.0
      %1526 = vmatprep.subr.mxu0 0.0
      %1527 = vmatpush2.msra.mxu0 0.0
      %1528 = vmatprep.mubr.f32.mxu0 0.0
      %1529 = vmatmul.mubr.f32.gmra.mxu0 %v1439
      %v1530 = vpop.f32.mrf.mxu0
      %v1531 = vadd.f32 0.0, %v1530
      %v1532 = vpop.f32.mrf.mxu0
      %1533 = vmatprep.mubr.f32.mxu0 0.0
      %1534 = vmatmul.mubr.f32.gmra.mxu0 %v1440
      %v1535 = vpop.f32.mrf.mxu0
      %v1536 = vadd.f32 0.0, %v1535
      %v1537 = vpop.f32.mrf.mxu0
      %1538 = vmatprep.mubr.f32.mxu0 0.0
      %1539 = vmatmul.mubr.f32.gmra.mxu0 %v1441
      %v1540 = vpop.f32.mrf.mxu0
      %v1541 = vadd.f32 0.0, %v1540
      %v1542 = vpop.f32.mrf.mxu0
      %1543 = vmatprep.mubr.f32.mxu0 0.0
      %1544 = vmatmul.mubr.f32.gmra.mxu0 %v1442
      %v1545 = vpop.f32.mrf.mxu0
      %v1546 = vadd.f32 0.0, %v1545
      %v1547 = vpop.f32.mrf.mxu0
      %1548 = vmatprep.mubr.f32.mxu0 0.0
      %1549 = vmatmul.mubr.f32.gmra.mxu0 %v1443
      %v1550 = vpop.f32.mrf.mxu0
      %v1551 = vadd.f32 0.0, %v1550
      %v1552 = vpop.f32.mrf.mxu0
      %1553 = vmatprep.mubr.f32.mxu0 0.0
      %1554 = vmatmul.mubr.f32.gmra.mxu0 %v1444
      %v1555 = vpop.f32.mrf.mxu0
      %v1556 = vadd.f32 0.0, %v1555
      %v1557 = vpop.f32.mrf.mxu0
      %1558 = vmatprep.mubr.f32.mxu0 0.0
      %1559 = vmatmul.mubr.f32.gmra.mxu0 %v1445
      %v1560 = vpop.f32.mrf.mxu0
      %v1561 = vadd.f32 0.0, %v1560
      %v1562 = vpop.f32.mrf.mxu0
      %1563 = vmatprep.mubr.f32.mxu0 0.0
      %1564 = vmatmul.mubr.f32.gmra.mxu0 %v1446
      %v1565 = vpop.f32.mrf.mxu0
      %v1566 = vadd.f32 0.0, %v1565
      %v1567 = vpop.f32.mrf.mxu0
      %1568 = vdwg.mxu0
      %v1569 = vadd.f32 %v1431, %v1531
      %v1570 = vadd.f32 %v1432, %v1536
      %v1571 = vadd.f32 %v1433, %v1541
      %v1572 = vadd.f32 %v1434, %v1546
      %v1573 = vadd.f32 %v1435, %v1551
      %v1574 = vadd.f32 %v1436, %v1556
      %v1575 = vadd.f32 %v1437, %v1561
      %v1576 = vadd.f32 %v1438, %v1566
      %v1577 = vld [vmem:[%s895 + $0x2] sm:$0xff]
      %v1578 = vld [vmem:[%s895 + $0x12] sm:$0xff]
      %v1579 = vld [vmem:[%s895 + $0x22] sm:$0xff]
      %v1580 = vld [vmem:[%s895 + $0x32] sm:$0xff]
      %v1581 = vld [vmem:[%s895 + $0x42] sm:$0xff]
      %v1582 = vld [vmem:[%s895 + $0x52] sm:$0xff]
      %v1583 = vld [vmem:[%s895 + $0x62] sm:$0xff]
      %v1584 = vld [vmem:[%s895 + $0x72] sm:$0xff]
      %s1585 = scalar_lea.vmem %s2, 640
      %v1586 = vld [vmem:[%s1585] sm:$0xff]
      %v1587 = vld [vmem:[%s1585 + $0x8] sm:$0xff]
      %v1588 = vld [vmem:[%s1585 + $0x10] sm:$0xff]
      %v1589 = vld [vmem:[%s1585 + $0x18] sm:$0xff]
      %v1590 = vld [vmem:[%s1585 + $0x20] sm:$0xff]
      %v1591 = vld [vmem:[%s1585 + $0x28] sm:$0xff]
      %v1592 = vld [vmem:[%s1585 + $0x30] sm:$0xff]
      %v1593 = vld [vmem:[%s1585 + $0x38] sm:$0xff]
      %v1594 = vld [vmem:[%s1585 + $0x40] sm:$0xff]
      %v1595 = vld [vmem:[%s1585 + $0x48] sm:$0xff]
      %v1596 = vld [vmem:[%s1585 + $0x50] sm:$0xff]
      %v1597 = vld [vmem:[%s1585 + $0x58] sm:$0xff]
      %v1598 = vld [vmem:[%s1585 + $0x60] sm:$0xff]
      %v1599 = vld [vmem:[%s1585 + $0x68] sm:$0xff]
      %v1600 = vld [vmem:[%s1585 + $0x70] sm:$0xff]
      %v1601 = vld [vmem:[%s1585 + $0x78] sm:$0xff]
      %1602 = vmatprep.subr.mxu0 0.0
      %1603 = vmatpush1.msra.mxu0 %v1601
      %1604 = vmatprep.subr.mxu0 0.0
      %1605 = vmatpush1.msra.mxu0 %v1600
      %1606 = vmatprep.subr.mxu0 0.0
      %1607 = vmatpush1.msra.mxu0 %v1599
      %1608 = vmatprep.subr.mxu0 0.0
      %1609 = vmatpush1.msra.mxu0 %v1598
      %1610 = vmatprep.subr.mxu0 0.0
      %1611 = vmatpush1.msra.mxu0 %v1597
      %1612 = vmatprep.subr.mxu0 0.0
      %1613 = vmatpush1.msra.mxu0 %v1596
      %1614 = vmatprep.subr.mxu0 0.0
      %1615 = vmatpush1.msra.mxu0 %v1595
      %1616 = vmatprep.subr.mxu0 0.0
      %1617 = vmatpush1.msra.mxu0 %v1594
      %1618 = vmatprep.subr.mxu0 0.0
      %1619 = vmatpush1.msra.mxu0 %v1593
      %1620 = vmatprep.subr.mxu0 0.0
      %1621 = vmatpush1.msra.mxu0 %v1592
      %1622 = vmatprep.subr.mxu0 0.0
      %1623 = vmatpush1.msra.mxu0 %v1591
      %1624 = vmatprep.subr.mxu0 0.0
      %1625 = vmatpush1.msra.mxu0 %v1590
      %1626 = vmatprep.subr.mxu0 0.0
      %1627 = vmatpush1.msra.mxu0 %v1589
      %1628 = vmatprep.subr.mxu0 0.0
      %1629 = vmatpush1.msra.mxu0 %v1588
      %1630 = vmatprep.subr.mxu0 0.0
      %1631 = vmatpush1.msra.mxu0 %v1587
      %1632 = vmatprep.subr.mxu0 0.0
      %1633 = vmatpush1.msra.mxu0 %v1586
      %1634 = vmatprep.subr.mxu0 0.0
      %1635 = vmatpush2.msra.mxu0 0.0
      %1636 = vmatprep.subr.mxu0 0.0
      %1637 = vmatpush2.msra.mxu0 0.0
      %1638 = vmatprep.subr.mxu0 0.0
      %1639 = vmatpush2.msra.mxu0 0.0
      %1640 = vmatprep.subr.mxu0 0.0
      %1641 = vmatpush2.msra.mxu0 0.0
      %1642 = vmatprep.subr.mxu0 0.0
      %1643 = vmatpush2.msra.mxu0 0.0
      %1644 = vmatprep.subr.mxu0 0.0
      %1645 = vmatpush2.msra.mxu0 0.0
      %1646 = vmatprep.subr.mxu0 0.0
      %1647 = vmatpush2.msra.mxu0 0.0
      %1648 = vmatprep.subr.mxu0 0.0
      %1649 = vmatpush2.msra.mxu0 0.0
      %1650 = vmatprep.subr.mxu0 0.0
      %1651 = vmatpush2.msra.mxu0 0.0
      %1652 = vmatprep.subr.mxu0 0.0
      %1653 = vmatpush2.msra.mxu0 0.0
      %1654 = vmatprep.subr.mxu0 0.0
      %1655 = vmatpush2.msra.mxu0 0.0
      %1656 = vmatprep.subr.mxu0 0.0
      %1657 = vmatpush2.msra.mxu0 0.0
      %1658 = vmatprep.subr.mxu0 0.0
      %1659 = vmatpush2.msra.mxu0 0.0
      %1660 = vmatprep.subr.mxu0 0.0
      %1661 = vmatpush2.msra.mxu0 0.0
      %1662 = vmatprep.subr.mxu0 0.0
      %1663 = vmatpush2.msra.mxu0 0.0
      %1664 = vmatprep.subr.mxu0 0.0
      %1665 = vmatpush2.msra.mxu0 0.0
      %1666 = vmatprep.mubr.f32.mxu0 0.0
      %1667 = vmatmul.mubr.f32.gmra.mxu0 %v1577
      %v1668 = vpop.f32.mrf.mxu0
      %v1669 = vadd.f32 0.0, %v1668
      %v1670 = vpop.f32.mrf.mxu0
      %1671 = vmatprep.mubr.f32.mxu0 0.0
      %1672 = vmatmul.mubr.f32.gmra.mxu0 %v1578
      %v1673 = vpop.f32.mrf.mxu0
      %v1674 = vadd.f32 0.0, %v1673
      %v1675 = vpop.f32.mrf.mxu0
      %1676 = vmatprep.mubr.f32.mxu0 0.0
      %1677 = vmatmul.mubr.f32.gmra.mxu0 %v1579
      %v1678 = vpop.f32.mrf.mxu0
      %v1679 = vadd.f32 0.0, %v1678
      %v1680 = vpop.f32.mrf.mxu0
      %1681 = vmatprep.mubr.f32.mxu0 0.0
      %1682 = vmatmul.mubr.f32.gmra.mxu0 %v1580
      %v1683 = vpop.f32.mrf.mxu0
      %v1684 = vadd.f32 0.0, %v1683
      %v1685 = vpop.f32.mrf.mxu0
      %1686 = vmatprep.mubr.f32.mxu0 0.0
      %1687 = vmatmul.mubr.f32.gmra.mxu0 %v1581
      %v1688 = vpop.f32.mrf.mxu0
      %v1689 = vadd.f32 0.0, %v1688
      %v1690 = vpop.f32.mrf.mxu0
      %1691 = vmatprep.mubr.f32.mxu0 0.0
      %1692 = vmatmul.mubr.f32.gmra.mxu0 %v1582
      %v1693 = vpop.f32.mrf.mxu0
      %v1694 = vadd.f32 0.0, %v1693
      %v1695 = vpop.f32.mrf.mxu0
      %1696 = vmatprep.mubr.f32.mxu0 0.0
      %1697 = vmatmul.mubr.f32.gmra.mxu0 %v1583
      %v1698 = vpop.f32.mrf.mxu0
      %v1699 = vadd.f32 0.0, %v1698
      %v1700 = vpop.f32.mrf.mxu0
      %1701 = vmatprep.mubr.f32.mxu0 0.0
      %1702 = vmatmul.mubr.f32.gmra.mxu0 %v1584
      %v1703 = vpop.f32.mrf.mxu0
      %v1704 = vadd.f32 0.0, %v1703
      %v1705 = vpop.f32.mrf.mxu0
      %1706 = vdwg.mxu0
      %v1707 = vadd.f32 %v1569, %v1669
      %v1708 = vadd.f32 %v1570, %v1674
      %v1709 = vadd.f32 %v1571, %v1679
      %v1710 = vadd.f32 %v1572, %v1684
      %v1711 = vadd.f32 %v1573, %v1689
      %v1712 = vadd.f32 %v1574, %v1694
      %v1713 = vadd.f32 %v1575, %v1699
      %v1714 = vadd.f32 %v1576, %v1704
      %s1715 = scalar_lea.vmem [#allocation2], 32
      %v1716 = vld [vmem:[%s1715] sm:$0xff]
      %v1717 = vld [vmem:[%s1715 + $0x10] sm:$0xff]
      %v1718 = vld [vmem:[%s1715 + $0x20] sm:$0xff]
      %v1719 = vld [vmem:[%s1715 + $0x30] sm:$0xff]
      %v1720 = vld [vmem:[%s1715 + $0x40] sm:$0xff]
      %v1721 = vld [vmem:[%s1715 + $0x50] sm:$0xff]
      %v1722 = vld [vmem:[%s1715 + $0x60] sm:$0xff]
      %v1723 = vld [vmem:[%s1715 + $0x70] sm:$0xff]
      %s1724 = scalar_lea.vmem %s2, 768
      %v1725 = vld [vmem:[%s1724] sm:$0xff]
      %v1726 = vld [vmem:[%s1724 + $0x8] sm:$0xff]
      %v1727 = vld [vmem:[%s1724 + $0x10] sm:$0xff]
      %v1728 = vld [vmem:[%s1724 + $0x18] sm:$0xff]
      %v1729 = vld [vmem:[%s1724 + $0x20] sm:$0xff]
      %v1730 = vld [vmem:[%s1724 + $0x28] sm:$0xff]
      %v1731 = vld [vmem:[%s1724 + $0x30] sm:$0xff]
      %v1732 = vld [vmem:[%s1724 + $0x38] sm:$0xff]
      %v1733 = vld [vmem:[%s1724 + $0x40] sm:$0xff]
      %v1734 = vld [vmem:[%s1724 + $0x48] sm:$0xff]
      %v1735 = vld [vmem:[%s1724 + $0x50] sm:$0xff]
      %v1736 = vld [vmem:[%s1724 + $0x58] sm:$0xff]
      %v1737 = vld [vmem:[%s1724 + $0x60] sm:$0xff]
      %v1738 = vld [vmem:[%s1724 + $0x68] sm:$0xff]
      %v1739 = vld [vmem:[%s1724 + $0x70] sm:$0xff]
      %v1740 = vld [vmem:[%s1724 + $0x78] sm:$0xff]
      %1741 = vmatprep.subr.mxu0 0.0
      %1742 = vmatpush1.msra.mxu0 %v1740
      %1743 = vmatprep.subr.mxu0 0.0
      %1744 = vmatpush1.msra.mxu0 %v1739
      %1745 = vmatprep.subr.mxu0 0.0
      %1746 = vmatpush1.msra.mxu0 %v1738
      %1747 = vmatprep.subr.mxu0 0.0
      %1748 = vmatpush1.msra.mxu0 %v1737
      %1749 = vmatprep.subr.mxu0 0.0
      %1750 = vmatpush1.msra.mxu0 %v1736
      %1751 = vmatprep.subr.mxu0 0.0
      %1752 = vmatpush1.msra.mxu0 %v1735
      %1753 = vmatprep.subr.mxu0 0.0
      %1754 = vmatpush1.msra.mxu0 %v1734
      %1755 = vmatprep.subr.mxu0 0.0
      %1756 = vmatpush1.msra.mxu0 %v1733
      %1757 = vmatprep.subr.mxu0 0.0
      %1758 = vmatpush1.msra.mxu0 %v1732
      %1759 = vmatprep.subr.mxu0 0.0
      %1760 = vmatpush1.msra.mxu0 %v1731
      %1761 = vmatprep.subr.mxu0 0.0
      %1762 = vmatpush1.msra.mxu0 %v1730
      %1763 = vmatprep.subr.mxu0 0.0
      %1764 = vmatpush1.msra.mxu0 %v1729
      %1765 = vmatprep.subr.mxu0 0.0
      %1766 = vmatpush1.msra.mxu0 %v1728
      %1767 = vmatprep.subr.mxu0 0.0
      %1768 = vmatpush1.msra.mxu0 %v1727
      %1769 = vmatprep.subr.mxu0 0.0
      %1770 = vmatpush1.msra.mxu0 %v1726
      %1771 = vmatprep.subr.mxu0 0.0
      %1772 = vmatpush1.msra.mxu0 %v1725
      %1773 = vmatprep.subr.mxu0 0.0
      %1774 = vmatpush2.msra.mxu0 0.0
      %1775 = vmatprep.subr.mxu0 0.0
      %1776 = vmatpush2.msra.mxu0 0.0
      %1777 = vmatprep.subr.mxu0 0.0
      %1778 = vmatpush2.msra.mxu0 0.0
      %1779 = vmatprep.subr.mxu0 0.0
      %1780 = vmatpush2.msra.mxu0 0.0
      %1781 = vmatprep.subr.mxu0 0.0
      %1782 = vmatpush2.msra.mxu0 0.0
      %1783 = vmatprep.subr.mxu0 0.0
      %1784 = vmatpush2.msra.mxu0 0.0
      %1785 = vmatprep.subr.mxu0 0.0
      %1786 = vmatpush2.msra.mxu0 0.0
      %1787 = vmatprep.subr.mxu0 0.0
      %1788 = vmatpush2.msra.mxu0 0.0
      %1789 = vmatprep.subr.mxu0 0.0
      %1790 = vmatpush2.msra.mxu0 0.0
      %1791 = vmatprep.subr.mxu0 0.0
      %1792 = vmatpush2.msra.mxu0 0.0
      %1793 = vmatprep.subr.mxu0 0.0
      %1794 = vmatpush2.msra.mxu0 0.0
      %1795 = vmatprep.subr.mxu0 0.0
      %1796 = vmatpush2.msra.mxu0 0.0
      %1797 = vmatprep.subr.mxu0 0.0
      %1798 = vmatpush2.msra.mxu0 0.0
      %1799 = vmatprep.subr.mxu0 0.0
      %1800 = vmatpush2.msra.mxu0 0.0
      %1801 = vmatprep.subr.mxu0 0.0
      %1802 = vmatpush2.msra.mxu0 0.0
      %1803 = vmatprep.subr.mxu0 0.0
      %1804 = vmatpush2.msra.mxu0 0.0
      %1805 = vmatprep.mubr.f32.mxu0 0.0
      %1806 = vmatmul.mubr.f32.gmra.mxu0 %v1716
      %v1807 = vpop.f32.mrf.mxu0
      %v1808 = vadd.f32 0.0, %v1807
      %v1809 = vpop.f32.mrf.mxu0
      %1810 = vmatprep.mubr.f32.mxu0 0.0
      %1811 = vmatmul.mubr.f32.gmra.mxu0 %v1717
      %v1812 = vpop.f32.mrf.mxu0
      %v1813 = vadd.f32 0.0, %v1812
      %v1814 = vpop.f32.mrf.mxu0
      %1815 = vmatprep.mubr.f32.mxu0 0.0
      %1816 = vmatmul.mubr.f32.gmra.mxu0 %v1718
      %v1817 = vpop.f32.mrf.mxu0
      %v1818 = vadd.f32 0.0, %v1817
      %v1819 = vpop.f32.mrf.mxu0
      %1820 = vmatprep.mubr.f32.mxu0 0.0
      %1821 = vmatmul.mubr.f32.gmra.mxu0 %v1719
      %v1822 = vpop.f32.mrf.mxu0
      %v1823 = vadd.f32 0.0, %v1822
      %v1824 = vpop.f32.mrf.mxu0
      %1825 = vmatprep.mubr.f32.mxu0 0.0
      %1826 = vmatmul.mubr.f32.gmra.mxu0 %v1720
      %v1827 = vpop.f32.mrf.mxu0
      %v1828 = vadd.f32 0.0, %v1827
      %v1829 = vpop.f32.mrf.mxu0
      %1830 = vmatprep.mubr.f32.mxu0 0.0
      %1831 = vmatmul.mubr.f32.gmra.mxu0 %v1721
      %v1832 = vpop.f32.mrf.mxu0
      %v1833 = vadd.f32 0.0, %v1832
      %v1834 = vpop.f32.mrf.mxu0
      %1835 = vmatprep.mubr.f32.mxu0 0.0
      %1836 = vmatmul.mubr.f32.gmra.mxu0 %v1722
      %v1837 = vpop.f32.mrf.mxu0
      %v1838 = vadd.f32 0.0, %v1837
      %v1839 = vpop.f32.mrf.mxu0
      %1840 = vmatprep.mubr.f32.mxu0 0.0
      %1841 = vmatmul.mubr.f32.gmra.mxu0 %v1723
      %v1842 = vpop.f32.mrf.mxu0
      %v1843 = vadd.f32 0.0, %v1842
      %v1844 = vpop.f32.mrf.mxu0
      %1845 = vdwg.mxu0
      %v1846 = vadd.f32 %v1707, %v1808
      %v1847 = vadd.f32 %v1708, %v1813
      %v1848 = vadd.f32 %v1709, %v1818
      %v1849 = vadd.f32 %v1710, %v1823
      %v1850 = vadd.f32 %v1711, %v1828
      %v1851 = vadd.f32 %v1712, %v1833
      %v1852 = vadd.f32 %v1713, %v1838
      %v1853 = vadd.f32 %v1714, %v1843
      %v1854 = vld [vmem:[%s1715 + $0x1] sm:$0xff]
      %v1855 = vld [vmem:[%s1715 + $0x11] sm:$0xff]
      %v1856 = vld [vmem:[%s1715 + $0x21] sm:$0xff]
      %v1857 = vld [vmem:[%s1715 + $0x31] sm:$0xff]
      %v1858 = vld [vmem:[%s1715 + $0x41] sm:$0xff]
      %v1859 = vld [vmem:[%s1715 + $0x51] sm:$0xff]
      %v1860 = vld [vmem:[%s1715 + $0x61] sm:$0xff]
      %v1861 = vld [vmem:[%s1715 + $0x71] sm:$0xff]
      %s1862 = scalar_lea.vmem %s2, 896
      %v1863 = vld [vmem:[%s1862] sm:$0xff]
      %v1864 = vld [vmem:[%s1862 + $0x8] sm:$0xff]
      %v1865 = vld [vmem:[%s1862 + $0x10] sm:$0xff]
      %v1866 = vld [vmem:[%s1862 + $0x18] sm:$0xff]
      %v1867 = vld [vmem:[%s1862 + $0x20] sm:$0xff]
      %v1868 = vld [vmem:[%s1862 + $0x28] sm:$0xff]
      %v1869 = vld [vmem:[%s1862 + $0x30] sm:$0xff]
      %v1870 = vld [vmem:[%s1862 + $0x38] sm:$0xff]
      %v1871 = vld [vmem:[%s1862 + $0x40] sm:$0xff]
      %v1872 = vld [vmem:[%s1862 + $0x48] sm:$0xff]
      %v1873 = vld [vmem:[%s1862 + $0x50] sm:$0xff]
      %v1874 = vld [vmem:[%s1862 + $0x58] sm:$0xff]
      %v1875 = vld [vmem:[%s1862 + $0x60] sm:$0xff]
      %v1876 = vld [vmem:[%s1862 + $0x68] sm:$0xff]
      %v1877 = vld [vmem:[%s1862 + $0x70] sm:$0xff]
      %v1878 = vld [vmem:[%s1862 + $0x78] sm:$0xff]
      %1879 = vmatprep.subr.mxu0 0.0
      %1880 = vmatpush1.msra.mxu0 %v1878
      %1881 = vmatprep.subr.mxu0 0.0
      %1882 = vmatpush1.msra.mxu0 %v1877
      %1883 = vmatprep.subr.mxu0 0.0
      %1884 = vmatpush1.msra.mxu0 %v1876
      %1885 = vmatprep.subr.mxu0 0.0
      %1886 = vmatpush1.msra.mxu0 %v1875
      %1887 = vmatprep.subr.mxu0 0.0
      %1888 = vmatpush1.msra.mxu0 %v1874
      %1889 = vmatprep.subr.mxu0 0.0
      %1890 = vmatpush1.msra.mxu0 %v1873
      %1891 = vmatprep.subr.mxu0 0.0
      %1892 = vmatpush1.msra.mxu0 %v1872
      %1893 = vmatprep.subr.mxu0 0.0
      %1894 = vmatpush1.msra.mxu0 %v1871
      %1895 = vmatprep.subr.mxu0 0.0
      %1896 = vmatpush1.msra.mxu0 %v1870
      %1897 = vmatprep.subr.mxu0 0.0
      %1898 = vmatpush1.msra.mxu0 %v1869
      %1899 = vmatprep.subr.mxu0 0.0
      %1900 = vmatpush1.msra.mxu0 %v1868
      %1901 = vmatprep.subr.mxu0 0.0
      %1902 = vmatpush1.msra.mxu0 %v1867
      %1903 = vmatprep.subr.mxu0 0.0
      %1904 = vmatpush1.msra.mxu0 %v1866
      %1905 = vmatprep.subr.mxu0 0.0
      %1906 = vmatpush1.msra.mxu0 %v1865
      %1907 = vmatprep.subr.mxu0 0.0
      %1908 = vmatpush1.msra.mxu0 %v1864
      %1909 = vmatprep.subr.mxu0 0.0
      %1910 = vmatpush1.msra.mxu0 %v1863
      %1911 = vmatprep.subr.mxu0 0.0
      %1912 = vmatpush2.msra.mxu0 0.0
      %1913 = vmatprep.subr.mxu0 0.0
      %1914 = vmatpush2.msra.mxu0 0.0
      %1915 = vmatprep.subr.mxu0 0.0
      %1916 = vmatpush2.msra.mxu0 0.0
      %1917 = vmatprep.subr.mxu0 0.0
      %1918 = vmatpush2.msra.mxu0 0.0
      %1919 = vmatprep.subr.mxu0 0.0
      %1920 = vmatpush2.msra.mxu0 0.0
      %1921 = vmatprep.subr.mxu0 0.0
      %1922 = vmatpush2.msra.mxu0 0.0
      %1923 = vmatprep.subr.mxu0 0.0
      %1924 = vmatpush2.msra.mxu0 0.0
      %1925 = vmatprep.subr.mxu0 0.0
      %1926 = vmatpush2.msra.mxu0 0.0
      %1927 = vmatprep.subr.mxu0 0.0
      %1928 = vmatpush2.msra.mxu0 0.0
      %1929 = vmatprep.subr.mxu0 0.0
      %1930 = vmatpush2.msra.mxu0 0.0
      %1931 = vmatprep.subr.mxu0 0.0
      %1932 = vmatpush2.msra.mxu0 0.0
      %1933 = vmatprep.subr.mxu0 0.0
      %1934 = vmatpush2.msra.mxu0 0.0
      %1935 = vmatprep.subr.mxu0 0.0
      %1936 = vmatpush2.msra.mxu0 0.0
      %1937 = vmatprep.subr.mxu0 0.0
      %1938 = vmatpush2.msra.mxu0 0.0
      %1939 = vmatprep.subr.mxu0 0.0
      %1940 = vmatpush2.msra.mxu0 0.0
      %1941 = vmatprep.subr.mxu0 0.0
      %1942 = vmatpush2.msra.mxu0 0.0
      %1943 = vmatprep.mubr.f32.mxu0 0.0
      %1944 = vmatmul.mubr.f32.gmra.mxu0 %v1854
      %v1945 = vpop.f32.mrf.mxu0
      %v1946 = vadd.f32 0.0, %v1945
      %v1947 = vpop.f32.mrf.mxu0
      %1948 = vmatprep.mubr.f32.mxu0 0.0
      %1949 = vmatmul.mubr.f32.gmra.mxu0 %v1855
      %v1950 = vpop.f32.mrf.mxu0
      %v1951 = vadd.f32 0.0, %v1950
      %v1952 = vpop.f32.mrf.mxu0
      %1953 = vmatprep.mubr.f32.mxu0 0.0
      %1954 = vmatmul.mubr.f32.gmra.mxu0 %v1856
      %v1955 = vpop.f32.mrf.mxu0
      %v1956 = vadd.f32 0.0, %v1955
      %v1957 = vpop.f32.mrf.mxu0
      %1958 = vmatprep.mubr.f32.mxu0 0.0
      %1959 = vmatmul.mubr.f32.gmra.mxu0 %v1857
      %v1960 = vpop.f32.mrf.mxu0
      %v1961 = vadd.f32 0.0, %v1960
      %v1962 = vpop.f32.mrf.mxu0
      %1963 = vmatprep.mubr.f32.mxu0 0.0
      %1964 = vmatmul.mubr.f32.gmra.mxu0 %v1858
      %v1965 = vpop.f32.mrf.mxu0
      %v1966 = vadd.f32 0.0, %v1965
      %v1967 = vpop.f32.mrf.mxu0
      %1968 = vmatprep.mubr.f32.mxu0 0.0
      %1969 = vmatmul.mubr.f32.gmra.mxu0 %v1859
      %v1970 = vpop.f32.mrf.mxu0
      %v1971 = vadd.f32 0.0, %v1970
      %v1972 = vpop.f32.mrf.mxu0
      %1973 = vmatprep.mubr.f32.mxu0 0.0
      %1974 = vmatmul.mubr.f32.gmra.mxu0 %v1860
      %v1975 = vpop.f32.mrf.mxu0
      %v1976 = vadd.f32 0.0, %v1975
      %v1977 = vpop.f32.mrf.mxu0
      %1978 = vmatprep.mubr.f32.mxu0 0.0
      %1979 = vmatmul.mubr.f32.gmra.mxu0 %v1861
      %v1980 = vpop.f32.mrf.mxu0
      %v1981 = vadd.f32 0.0, %v1980
      %v1982 = vpop.f32.mrf.mxu0
      %1983 = vdwg.mxu0
      %v1984 = vadd.f32 %v1846, %v1946
      %v1985 = vadd.f32 %v1847, %v1951
      %v1986 = vadd.f32 %v1848, %v1956
      %v1987 = vadd.f32 %v1849, %v1961
      %v1988 = vadd.f32 %v1850, %v1966
      %v1989 = vadd.f32 %v1851, %v1971
      %v1990 = vadd.f32 %v1852, %v1976
      %v1991 = vadd.f32 %v1853, %v1981
      %v1992 = vld [vmem:[%s1715 + $0x2] sm:$0xff]
      %v1993 = vld [vmem:[%s1715 + $0x12] sm:$0xff]
      %v1994 = vld [vmem:[%s1715 + $0x22] sm:$0xff]
      %v1995 = vld [vmem:[%s1715 + $0x32] sm:$0xff]
      %v1996 = vld [vmem:[%s1715 + $0x42] sm:$0xff]
      %v1997 = vld [vmem:[%s1715 + $0x52] sm:$0xff]
      %v1998 = vld [vmem:[%s1715 + $0x62] sm:$0xff]
      %v1999 = vld [vmem:[%s1715 + $0x72] sm:$0xff]
      %s2000 = scalar_lea.vmem %s2, 1024
      %v2001 = vld [vmem:[%s2000] sm:$0xff]
      %v2002 = vld [vmem:[%s2000 + $0x8] sm:$0xff]
      %v2003 = vld [vmem:[%s2000 + $0x10] sm:$0xff]
      %v2004 = vld [vmem:[%s2000 + $0x18] sm:$0xff]
      %v2005 = vld [vmem:[%s2000 + $0x20] sm:$0xff]
      %v2006 = vld [vmem:[%s2000 + $0x28] sm:$0xff]
      %v2007 = vld [vmem:[%s2000 + $0x30] sm:$0xff]
      %v2008 = vld [vmem:[%s2000 + $0x38] sm:$0xff]
      %v2009 = vld [vmem:[%s2000 + $0x40] sm:$0xff]
      %v2010 = vld [vmem:[%s2000 + $0x48] sm:$0xff]
      %v2011 = vld [vmem:[%s2000 + $0x50] sm:$0xff]
      %v2012 = vld [vmem:[%s2000 + $0x58] sm:$0xff]
      %v2013 = vld [vmem:[%s2000 + $0x60] sm:$0xff]
      %v2014 = vld [vmem:[%s2000 + $0x68] sm:$0xff]
      %v2015 = vld [vmem:[%s2000 + $0x70] sm:$0xff]
      %v2016 = vld [vmem:[%s2000 + $0x78] sm:$0xff]
      %2017 = vmatprep.subr.mxu0 0.0
      %2018 = vmatpush1.msra.mxu0 %v2016
      %2019 = vmatprep.subr.mxu0 0.0
      %2020 = vmatpush1.msra.mxu0 %v2015
      %2021 = vmatprep.subr.mxu0 0.0
      %2022 = vmatpush1.msra.mxu0 %v2014
      %2023 = vmatprep.subr.mxu0 0.0
      %2024 = vmatpush1.msra.mxu0 %v2013
      %2025 = vmatprep.subr.mxu0 0.0
      %2026 = vmatpush1.msra.mxu0 %v2012
      %2027 = vmatprep.subr.mxu0 0.0
      %2028 = vmatpush1.msra.mxu0 %v2011
      %2029 = vmatprep.subr.mxu0 0.0
      %2030 = vmatpush1.msra.mxu0 %v2010
      %2031 = vmatprep.subr.mxu0 0.0
      %2032 = vmatpush1.msra.mxu0 %v2009
      %2033 = vmatprep.subr.mxu0 0.0
      %2034 = vmatpush1.msra.mxu0 %v2008
      %2035 = vmatprep.subr.mxu0 0.0
      %2036 = vmatpush1.msra.mxu0 %v2007
      %2037 = vmatprep.subr.mxu0 0.0
      %2038 = vmatpush1.msra.mxu0 %v2006
      %2039 = vmatprep.subr.mxu0 0.0
      %2040 = vmatpush1.msra.mxu0 %v2005
      %2041 = vmatprep.subr.mxu0 0.0
      %2042 = vmatpush1.msra.mxu0 %v2004
      %2043 = vmatprep.subr.mxu0 0.0
      %2044 = vmatpush1.msra.mxu0 %v2003
      %2045 = vmatprep.subr.mxu0 0.0
      %2046 = vmatpush1.msra.mxu0 %v2002
      %2047 = vmatprep.subr.mxu0 0.0
      %2048 = vmatpush1.msra.mxu0 %v2001
      %2049 = vmatprep.subr.mxu0 0.0
      %2050 = vmatpush2.msra.mxu0 0.0
      %2051 = vmatprep.subr.mxu0 0.0
      %2052 = vmatpush2.msra.mxu0 0.0
      %2053 = vmatprep.subr.mxu0 0.0
      %2054 = vmatpush2.msra.mxu0 0.0
      %2055 = vmatprep.subr.mxu0 0.0
      %2056 = vmatpush2.msra.mxu0 0.0
      %2057 = vmatprep.subr.mxu0 0.0
      %2058 = vmatpush2.msra.mxu0 0.0
      %2059 = vmatprep.subr.mxu0 0.0
      %2060 = vmatpush2.msra.mxu0 0.0
      %2061 = vmatprep.subr.mxu0 0.0
      %2062 = vmatpush2.msra.mxu0 0.0
      %2063 = vmatprep.subr.mxu0 0.0
      %2064 = vmatpush2.msra.mxu0 0.0
      %2065 = vmatprep.subr.mxu0 0.0
      %2066 = vmatpush2.msra.mxu0 0.0
      %2067 = vmatprep.subr.mxu0 0.0
      %2068 = vmatpush2.msra.mxu0 0.0
      %2069 = vmatprep.subr.mxu0 0.0
      %2070 = vmatpush2.msra.mxu0 0.0
      %2071 = vmatprep.subr.mxu0 0.0
      %2072 = vmatpush2.msra.mxu0 0.0
      %2073 = vmatprep.subr.mxu0 0.0
      %2074 = vmatpush2.msra.mxu0 0.0
      %2075 = vmatprep.subr.mxu0 0.0
      %2076 = vmatpush2.msra.mxu0 0.0
      %2077 = vmatprep.subr.mxu0 0.0
      %2078 = vmatpush2.msra.mxu0 0.0
      %2079 = vmatprep.subr.mxu0 0.0
      %2080 = vmatpush2.msra.mxu0 0.0
      %2081 = vmatprep.mubr.f32.mxu0 0.0
      %2082 = vmatmul.mubr.f32.gmra.mxu0 %v1992
      %v2083 = vpop.f32.mrf.mxu0
      %v2084 = vadd.f32 0.0, %v2083
      %v2085 = vpop.f32.mrf.mxu0
      %2086 = vmatprep.mubr.f32.mxu0 0.0
      %2087 = vmatmul.mubr.f32.gmra.mxu0 %v1993
      %v2088 = vpop.f32.mrf.mxu0
      %v2089 = vadd.f32 0.0, %v2088
      %v2090 = vpop.f32.mrf.mxu0
      %2091 = vmatprep.mubr.f32.mxu0 0.0
      %2092 = vmatmul.mubr.f32.gmra.mxu0 %v1994
      %v2093 = vpop.f32.mrf.mxu0
      %v2094 = vadd.f32 0.0, %v2093
      %v2095 = vpop.f32.mrf.mxu0
      %2096 = vmatprep.mubr.f32.mxu0 0.0
      %2097 = vmatmul.mubr.f32.gmra.mxu0 %v1995
      %v2098 = vpop.f32.mrf.mxu0
      %v2099 = vadd.f32 0.0, %v2098
      %v2100 = vpop.f32.mrf.mxu0
      %2101 = vmatprep.mubr.f32.mxu0 0.0
      %2102 = vmatmul.mubr.f32.gmra.mxu0 %v1996
      %v2103 = vpop.f32.mrf.mxu0
      %v2104 = vadd.f32 0.0, %v2103
      %v2105 = vpop.f32.mrf.mxu0
      %2106 = vmatprep.mubr.f32.mxu0 0.0
      %2107 = vmatmul.mubr.f32.gmra.mxu0 %v1997
      %v2108 = vpop.f32.mrf.mxu0
      %v2109 = vadd.f32 0.0, %v2108
      %v2110 = vpop.f32.mrf.mxu0
      %2111 = vmatprep.mubr.f32.mxu0 0.0
      %2112 = vmatmul.mubr.f32.gmra.mxu0 %v1998
      %v2113 = vpop.f32.mrf.mxu0
      %v2114 = vadd.f32 0.0, %v2113
      %v2115 = vpop.f32.mrf.mxu0
      %2116 = vmatprep.mubr.f32.mxu0 0.0
      %2117 = vmatmul.mubr.f32.gmra.mxu0 %v1999
      %v2118 = vpop.f32.mrf.mxu0
      %v2119 = vadd.f32 0.0, %v2118
      %v2120 = vpop.f32.mrf.mxu0
      %2121 = vdwg.mxu0
      %v2122 = vadd.f32 %v1984, %v2084
      %v2123 = vadd.f32 %v1985, %v2089
      %v2124 = vadd.f32 %v1986, %v2094
      %v2125 = vadd.f32 %v1987, %v2099
      %v2126 = vadd.f32 %v1988, %v2104
      %v2127 = vadd.f32 %v1989, %v2109
      %v2128 = vadd.f32 %v1990, %v2114
      %v2129 = vadd.f32 %v1991, %v2119
      %v2130 = vadd.f32 %v2122, %v2123
      %v2131 = vadd.f32 %v2130, %v2124
      %v2132 = vadd.f32 %v2131, %v2125
      %v2133 = vadd.f32 %v2132, %v2126
      %v2134 = vadd.f32 %v2133, %v2127
      %v2135 = vadd.f32 %v2134, %v2128
      %v2136 = vadd.f32 %v2135, %v2129
      %v2137 = vrot.slane %v2136, 4
      %v2138 = vadd.f32 %v2136, %v2137
      %v2139 = vrot.slane %v2138, 2
      %v2140 = vadd.f32 %v2138, %v2139
      %v2141 = vrot.slane %v2140, 1
      %v2142 = vadd.f32 %v2140, %v2141
      %v2143 = vmul.f32 %v2142, 0.015625
      %v2144 = vsub.f32 %v2122, %v2143
      %v2145 = vsub.f32 %v2123, %v2143
      %v2146 = vsub.f32 %v2124, %v2143
      %v2147 = vsub.f32 %v2125, %v2143
      %v2148 = vsub.f32 %v2126, %v2143
      %v2149 = vsub.f32 %v2127, %v2143
      %v2150 = vsub.f32 %v2128, %v2143
      %v2151 = vsub.f32 %v2129, %v2143
      %v2152 = vmul.f32 %v2144, %v2144
      %v2153 = vmul.f32 %v2145, %v2145
      %v2154 = vmul.f32 %v2146, %v2146
      %v2155 = vmul.f32 %v2147, %v2147
      %v2156 = vmul.f32 %v2148, %v2148
      %v2157 = vmul.f32 %v2149, %v2149
      %v2158 = vmul.f32 %v2150, %v2150
      %v2159 = vmul.f32 %v2151, %v2151
      %v2160 = vadd.f32 %v2152, %v2153
      %v2161 = vadd.f32 %v2160, %v2154
      %v2162 = vadd.f32 %v2161, %v2155
      %v2163 = vadd.f32 %v2162, %v2156
      %v2164 = vadd.f32 %v2163, %v2157
      %v2165 = vadd.f32 %v2164, %v2158
      %v2166 = vadd.f32 %v2165, %v2159
      %v2167 = vrot.slane %v2166, 4
      %v2168 = vadd.f32 %v2166, %v2167
      %v2169 = vrot.slane %v2168, 2
      %v2170 = vadd.f32 %v2168, %v2169
      %v2171 = vrot.slane %v2170, 1
      %v2172 = vadd.f32 %v2170, %v2171
      %v2173 = vmul.f32 %v2172, 0.015625
      %v2174 = vadd.f32 %v2173, 1e-05
      %v2175 = vrsqrt.pop %v2174
      %v2176 = vmul.f32 %v2144, %v2175
      %v2177 = vmul.f32 %v2145, %v2175
      %v2178 = vmul.f32 %v2146, %v2175
      %v2179 = vmul.f32 %v2147, %v2175
      %v2180 = vmul.f32 %v2148, %v2175
      %v2181 = vmul.f32 %v2149, %v2175
      %v2182 = vmul.f32 %v2150, %v2175
      %v2183 = vmul.f32 %v2151, %v2175
      %v2184 = vxor.u32 %v2176, 2147483648
      %v2185 = vxor.u32 %v2177, 2147483648
      %v2186 = vxor.u32 %v2178, 2147483648
      %v2187 = vxor.u32 %v2179, 2147483648
      %v2188 = vxor.u32 %v2180, 2147483648
      %v2189 = vxor.u32 %v2181, 2147483648
      %v2190 = vxor.u32 %v2182, 2147483648
      %v2191 = vxor.u32 %v2183, 2147483648
      %v2192 = vmul.f32 %v2184, 1.442695
      %v2193 = vpow.pop %v2192
      %v2194 = vmul.f32 %v2185, 1.442695
      %v2195 = vpow.pop %v2194
      %v2196 = vmul.f32 %v2186, 1.442695
      %v2197 = vpow.pop %v2196
      %v2198 = vmul.f32 %v2187, 1.442695
      %v2199 = vpow.pop %v2198
      %v2200 = vmul.f32 %v2188, 1.442695
      %v2201 = vpow.pop %v2200
      %v2202 = vmul.f32 %v2189, 1.442695
      %v2203 = vpow.pop %v2202
      %v2204 = vmul.f32 %v2190, 1.442695
      %v2205 = vpow.pop %v2204
      %v2206 = vmul.f32 %v2191, 1.442695
      %v2207 = vpow.pop %v2206
      %v2208 = vadd.f32 %v2193, 1.0
      %v2209 = vadd.f32 %v2195, 1.0
      %v2210 = vadd.f32 %v2197, 1.0
      %v2211 = vadd.f32 %v2199, 1.0
      %v2212 = vadd.f32 %v2201, 1.0
      %v2213 = vadd.f32 %v2203, 1.0
      %v2214 = vadd.f32 %v2205, 1.0
      %v2215 = vadd.f32 %v2207, 1.0
      %v2216 = vrcp.pop %v2208
      %v2217 = vmul.f32 1.0, %v2216
      %v2218 = vrcp.pop %v2209
      %v2219 = vmul.f32 1.0, %v2218
      %v2220 = vrcp.pop %v2210
      %v2221 = vmul.f32 1.0, %v2220
      %v2222 = vrcp.pop %v2211
      %v2223 = vmul.f32 1.0, %v2222
      %v2224 = vrcp.pop %v2212
      %v2225 = vmul.f32 1.0, %v2224
      %v2226 = vrcp.pop %v2213
      %v2227 = vmul.f32 1.0, %v2226
      %v2228 = vrcp.pop %v2214
      %v2229 = vmul.f32 1.0, %v2228
      %v2230 = vrcp.pop %v2215
      %v2231 = vmul.f32 1.0, %v2230
      %v2232 = vmul.f32 %v2176, %v2217
      %v2233 = vmul.f32 %v2177, %v2219
      %v2234 = vmul.f32 %v2178, %v2221
      %v2235 = vmul.f32 %v2179, %v2223
      %v2236 = vmul.f32 %v2180, %v2225
      %v2237 = vmul.f32 %v2181, %v2227
      %v2238 = vmul.f32 %v2182, %v2229
      %v2239 = vmul.f32 %v2183, %v2231
      %v2240 = vpack.c.bf16 %v2232, %v2232
      %v2241 = vpack.c.bf16 %v2233, %v2233
      %v2242 = vpack.c.bf16 %v2234, %v2234
      %v2243 = vpack.c.bf16 %v2235, %v2235
      %v2244 = vpack.c.bf16 %v2236, %v2236
      %v2245 = vpack.c.bf16 %v2237, %v2237
      %v2246 = vpack.c.bf16 %v2238, %v2238
      %v2247 = vpack.c.bf16 %v2239, %v2239
      %2248 = vst [vmem:[%s170] sm:$0xf] %v2240
      %2249 = vst [vmem:[%s170 + $0x4] sm:$0xf] %v2241
      %2250 = vst [vmem:[%s170 + $0x8] sm:$0xf] %v2242
      %2251 = vst [vmem:[%s170 + $0xc] sm:$0xf] %v2243
      %2252 = vst [vmem:[%s170 + $0x10] sm:$0xf] %v2244
      %2253 = vst [vmem:[%s170 + $0x14] sm:$0xf] %v2245
      %2254 = vst [vmem:[%s170 + $0x18] sm:$0xf] %v2246
      %2255 = vst [vmem:[%s170 + $0x1c] sm:$0xf] %v2247
      %p2256 = scmp.lt.s32.totalorder %s14, 1
      %s2257 = scalar_select %p2256, %s14, 1
      %s2258 = smul.addr %s2257, 8
      %s2259 = smul.addr %s2258, 4
      %s2260 = scalar_lea.vmem %s3, %s2259
      // Predicated region
      $region33: #{down_block_forward.1} parent=31 // pred_check
        %p2261 = pneg %p100
      $region34: #{down_block_forward.1} parent=31 // pred_check_branch
        %2263 = sbr.rel (%p2261) target = $region36
      $region35: #{down_block_forward.1} parent=31 // pred_region
        _
      $region36: #{down_block_forward.1} parent=31 // pred_fallthru
        _
    $region32: #{down_block_forward.1} parent=5 // pred_fallthru
      _
    %p2264 = scmp.le.s32.totalorder 2, %s9
    // Predicated region
    $region37: #{down_block_forward.1} parent=5 // pred_check
      %p2265 = pneg %p2264
    $region38: #{down_block_forward.1} parent=5 // pred_check_branch
      %2267 = sbr.rel (%p2265) target = $region40
    $region39: #{down_block_forward.1} parent=5 // pred_region
      %s2268 = ssub.s32 %s9, 2
      // Predicated region
      $region41: #{down_block_forward.1} parent=39 // pred_check
        %p2269 = pneg %p106
      $region42: #{down_block_forward.1} parent=39 // pred_check_branch
        %2271 = sbr.rel (%p2269) target = $region44
      $region43: #{down_block_forward.1} parent=39 // pred_region
        %p2272 = scmp.lt.s32.totalorder %s15, 1
        %s2273 = scalar_select %p2272, %s15, 1
        %s2274 = smul.addr %s2273, 8
        %s2275 = smul.addr %s2274, 4
        %s2276 = scalar_lea.vmem %s3, %s2275
      $region44: #{down_block_forward.1} parent=39 // pred_fallthru
        _
    $region40: #{down_block_forward.1} parent=5 // pred_fallthru
      _
  $region6: #{down_block_forward.1} parent=0 // loop_footer
    %s13 = sadd.s32 1, %s9
  $region7: #{down_block_forward.1} parent=0 // loop_footer_branch
    %8 = sbr.rel target = $region3
  $region8: #{down_block_forward.1} parent=0 // loop_exit
    _

</llo_original>
